<compile_context>
chip_gen: v7x
topology: tpu7x:2x2x1
jax: 0.10.0
libtpu: 0.0.40
codegen_flags: <defaults>
</compile_context>

<pallas_src>
import jax
import jax.numpy as jnp
from jax import lax
from jax.experimental import pallas as pl
from jax.experimental.pallas import tpu as pltpu


def _round_up(x, m):
    return ((x + m - 1) // m) * m


# ----------------------------------------------------------------------------
# Kernels
# ----------------------------------------------------------------------------
def _dense_tail(u_fm, i_fm, w1u_ref, w1i_ref, b1_ref, w2_ref, b2_ref,
                w3_ref, b3_ref, wfc_mlp_ref, wfc_mf_ref, bfc_ref, out_ref):
    """Shared dense math.  u_fm / i_fm are feature-major [2D, TILE_B] blocks
    (rows 0:D = MF embedding, rows D:2D = MLP embedding); batch on lanes."""
    f32 = jnp.float32
    D = u_fm.shape[0] // 2

    # ---- GMF branch: elementwise product (VPU, lane-dense) -----------------
    mf_out = u_fm[:D, :] * i_fm[:D, :]                              # [D, TB]

    # ---- MLP branch (concat-free, feature-major: h = W^T @ x) --------------
    h = (jnp.dot(w1u_ref[...], u_fm[D:, :], preferred_element_type=f32)
         + jnp.dot(w1i_ref[...], i_fm[D:, :], preferred_element_type=f32)
         + b1_ref[...])                                             # [D, TB]
    h = jnp.maximum(h, 0.0)
    h = jnp.dot(w2_ref[...], h, preferred_element_type=f32) + b2_ref[...]
    h = jnp.maximum(h, 0.0)                                         # [D/2, TB]
    h = jnp.dot(w3_ref[...], h, preferred_element_type=f32) + b3_ref[...]
    # no activation after the last MLP layer                        # [D/4, TB]

    # ---- Final FC: lane-dense VPU multiply + sublane reduce ----------------
    logits = (jnp.sum(wfc_mlp_ref[...] * h, axis=0, keepdims=True)
              + jnp.sum(wfc_mf_ref[...] * mf_out, axis=0, keepdims=True)
              + bfc_ref[...])                                       # [1, TB]
    out_ref[...] = jax.nn.sigmoid(logits)                           # lane-dense


def neumf_fused_kernel(uid_ref, iid_ref, utab_ref, itab_ref, *rest):
    """Gathers fused in-kernel: VMEM-resident feature-major tables, one-hot
    (table @ one-hot) MXU gather.  Used for small catalogs."""
    f32 = jnp.float32
    nu = utab_ref.shape[1]
    ni = itab_ref.shape[1]
    tb = uid_ref.shape[1]
    onehot_u = jnp.where(
        lax.broadcasted_iota(jnp.int32, (nu, tb), 0) == uid_ref[...], 1.0, 0.0)
    onehot_i = jnp.where(
        lax.broadcasted_iota(jnp.int32, (ni, tb), 0) == iid_ref[...], 1.0, 0.0)
    u_fm = jnp.dot(utab_ref[...], onehot_u, preferred_element_type=f32)  # [2D,TB]
    i_fm = jnp.dot(itab_ref[...], onehot_i, preferred_element_type=f32)  # [2D,TB]
    _dense_tail(u_fm, i_fm, *rest)


def neumf_stream_kernel(u_ref, i_ref, *rest):
    """Fallback: embeddings gathered in XLA glue, streamed feature-major."""
    _dense_tail(u_ref[...], i_ref[...], *rest)


# ----------------------------------------------------------------------------
# Parameter prep (one-time / load-time repack into the kernel layout)
# ----------------------------------------------------------------------------
def prepare_params(params):
    D = params["mf_user_emb"].shape[1]
    d4 = D // 4
    f32 = jnp.float32
    # Concatenated [N, 2D] tables, transposed to feature-major [2D, N] so both
    # the XLA fallback gather and the in-kernel gather put batch on lanes.
    user_tab_T = jnp.concatenate(
        [params["mf_user_emb"], params["mlp_user_emb"]], axis=1).T.astype(f32)
    item_tab_T = jnp.concatenate(
        [params["mf_item_emb"], params["mlp_item_emb"]], axis=1).T.astype(f32)
    w1 = params["w1"]
    return {
        "D": D,
        "user_tab_T": user_tab_T,                     # [2D, num_users]
        "item_tab_T": item_tab_T,                     # [2D, num_items]
        "w1u_T": w1[:D].T.astype(f32),                # [D, D]
        "w1i_T": w1[D:].T.astype(f32),                # [D, D]
        "b1": params["b1"].reshape(D, 1).astype(f32),
        "w2_T": params["w2"].T.astype(f32),           # [D/2, D]
        "b2": params["b2"].reshape(-1, 1).astype(f32),
        "w3_T": params["w3"].T.astype(f32),           # [D/4, D/2]
        "b3": params["b3"].reshape(-1, 1).astype(f32),
        "wfc_mlp": params["wfc"][:d4].astype(f32),    # [D/4, 1]
        "wfc_mf": params["wfc"][d4:].astype(f32),     # [D, 1]
        "bfc": params["bfc"].astype(f32),             # [1, 1]
    }


# ----------------------------------------------------------------------------
# Forward wrapper
# ----------------------------------------------------------------------------
def neumf_forward(uid, iid, prepared, *, tile_b=None,
                  fuse_gather_bytes=4 * 1024 * 1024):
    """NeuMF forward.  Returns sigmoid scores of shape [B, 1]."""
    D = prepared["D"]
    B = uid.shape[0]

    if tile_b is None:
        # Large tiles amortize the ~0.35us per-step pipeline overhead; keep
        # grid_b >= 2 for B > 128 so v7x's two TensorCores both get work.
        tile_b = max(128, min(2048, _round_up(pl.cdiv(B, 2), 128)))
    grid_b = pl.cdiv(B, tile_b)
    b_pad = grid_b * tile_b
    pad = b_pad - B

    uid_p = jnp.pad(uid.astype(jnp.int32), (0, pad))   # padded rows use id 0,
    iid_p = jnp.pad(iid.astype(jnp.int32), (0, pad))   # sliced off below

    weights = (prepared["w1u_T"], prepared["w1i_T"], prepared["b1"],
               prepared["w2_T"], prepared["b2"], prepared["w3_T"],
               prepared["b3"], prepared["wfc_mlp"], prepared["wfc_mf"],
               prepared["bfc"])

    def resident(x):
        # Whole array is one VMEM-resident block, reused at every grid step.
        return pl.BlockSpec(x.shape, lambda i: (0,) * x.ndim)

    weight_specs = [resident(w) for w in weights]
    out_shape = jax.ShapeDtypeStruct((1, b_pad), jnp.float32)
    out_spec = pl.BlockSpec((1, tile_b), lambda i: (0, i))
    cparams = pltpu.CompilerParams(
        dimension_semantics=("parallel",),     # megacore / v7x dual-TC split
        vmem_limit_bytes=32 * 1024 * 1024,     # explicit, safe on v5e/v6e/v7x
    )

    utab, itab = prepared["user_tab_T"], prepared["item_tab_T"]
    nu_pad = _round_up(utab.shape[1], 128)
    ni_pad = _round_up(itab.shape[1], 128)
    table_bytes = 4 * 2 * D * (nu_pad + ni_pad)
    onehot_bytes = 4 * (nu_pad + ni_pad) * tile_b
    fuse = (table_bytes <= fuse_gather_bytes) and (onehot_bytes <= fuse_gather_bytes)

    if fuse:
        # --- Fused gather: resident tables + streamed ids --------------------
        # Budget (4 MiB default) is well under v7x's 64 MiB physical / 32 MiB
        # scoped VMEM even with double-buffered id/out streams.
        utab_p = jnp.pad(utab, ((0, 0), (0, nu_pad - utab.shape[1])))
        itab_p = jnp.pad(itab, ((0, 0), (0, ni_pad - itab.shape[1])))
        id_spec = pl.BlockSpec((1, tile_b), lambda i: (0, i))
        out = pl.pallas_call(
            neumf_fused_kernel,
            grid=(grid_b,),
            out_shape=out_shape,
            in_specs=([id_spec, id_spec, resident(utab_p), resident(itab_p)]
                      + weight_specs),
            out_specs=out_spec,
            compiler_params=cparams,
        )(uid_p.reshape(1, b_pad), iid_p.reshape(1, b_pad),
          utab_p, itab_p, *weights)
    else:
        # --- Large-catalog fallback: 2 XLA gathers on concatenated tables ----
        # TODO(synk): replace with scalar-prefetched indices + per-row DMA
        # gather to remove this extra HBM round trip for huge tables too.
        u_fm = jnp.take(utab, uid_p, axis=1)   # [2D, b_pad], feature-major
        i_fm = jnp.take(itab, iid_p, axis=1)
        emb_spec = pl.BlockSpec((2 * D, tile_b), lambda i: (0, i))
        # v5e note: deeper input prefetch hides its slower HBM, e.g.
        #   pl.BlockSpec((2*D, tile_b), lambda i: (0, i),
        #                pipeline_mode=pl.Buffered(3))
        out = pl.pallas_call(
            neumf_stream_kernel,
            grid=(grid_b,),
            out_shape=out_shape,
            in_specs=[emb_spec, emb_spec] + weight_specs,
            out_specs=out_spec,
            compiler_params=cparams,
        )(u_fm, i_fm, *weights)

    return out[0, :B].reshape(B, 1)


# ----------------------------------------------------------------------------
# Init + pure-JAX reference (PyTorch-module semantics)
# ----------------------------------------------------------------------------
def init_params(key, num_users, num_items, latent_dim):
    D = latent_dim
    keys = jax.random.split(key, 12)
    s = 0.05
    return {
        "mf_user_emb": jax.random.normal(keys[0], (num_users, D), jnp.float32) * s,
        "mf_item_emb": jax.random.normal(keys[1], (num_items, D), jnp.float32) * s,
        "mlp_user_emb": jax.random.normal(keys[2], (num_users, D), jnp.float32) * s,
        "mlp_item_emb": jax.random.normal(keys[3], (num_items, D), jnp.float32) * s,
        # Linear weights stored as [in, out]; biases kept 2-D [1, out].
        "w1": jax.random.normal(keys[4], (2 * D, D), jnp.float32) * s,
        "b1": jax.random.normal(keys[5], (1, D), jnp.float32) * s,
        "w2": jax.random.normal(keys[6], (D, D // 2), jnp.float32) * s,
        "b2": jax.random.normal(keys[7], (1, D // 2), jnp.float32) * s,
        "w3": jax.random.normal(keys[8], (D // 2, D // 4), jnp.float32) * s,
        "b3": jax.random.normal(keys[9], (1, D // 4), jnp.float32) * s,
        "wfc": jax.random.normal(keys[10], (D // 4 + D, 1), jnp.float32) * s,
        "bfc": jax.random.normal(keys[11], (1, 1), jnp.float32) * s,
    }


def reference_forward(uid, iid, p):
    mf_u = p["mf_user_emb"][uid]
    mf_i = p["mf_item_emb"][iid]
    mlp_u = p["mlp_user_emb"][uid]
    mlp_i = p["mlp_item_emb"][iid]
    mf_out = mf_u * mf_i
    x = jnp.concatenate([mlp_u, mlp_i], axis=1)
    x = jax.nn.relu(x @ p["w1"] + p["b1"])
    x = jax.nn.relu(x @ p["w2"] + p["b2"])
    x = x @ p["w3"] + p["b3"]
    fused = jnp.concatenate([x, mf_out], axis=1)
    return jax.nn.sigmoid(fused @ p["wfc"] + p["bfc"])


if __name__ == "__main__":
    num_users, num_items, latent_dim = 100, 200, 32
    batch = 200   # not a multiple of 128: exercises padding + a 2-step grid

    key = jax.random.PRNGKey(0)
    pkey, ukey, ikey = jax.random.split(key, 3)
    params = init_params(pkey, num_users, num_items, latent_dim)
    prepared = prepare_params(params)

    uid = jax.random.randint(ukey, (batch,), 0, num_users, dtype=jnp.int32)
    iid = jax.random.randint(ikey, (batch,), 0, num_items, dtype=jnp.int32)

    ref = reference_forward(uid, iid, params)

    # Fused-gather path (small catalog: tables VMEM-resident, gather in-kernel).
    out_fused = jax.block_until_ready(neumf_forward(uid, iid, prepared))
    # Streamed path (gathers in XLA glue) — forced, to cover the fallback.
    out_stream = jax.block_until_ready(
        neumf_forward(uid, iid, prepared, fuse_gather_bytes=0))

    assert out_fused.shape == (batch, 1)
    assert out_stream.shape == (batch, 1)
    # Tolerance covers f32-matmul pass differences between XLA and Mosaic.
    assert jnp.allclose(out_fused, ref, atol=1e-4, rtol=1e-4), "fused mismatch"
    assert jnp.allclose(out_stream, ref, atol=1e-4, rtol=1e-4), "stream mismatch"

    print("KERNEL_OK")
</pallas_src>

<mosaic_0001>
module attributes {stable_mosaic.version = 11 : i64} {
  func.func @neumf_fused_kernel(%arg0: i32, %arg1: memref<1x128xi32, #tpu.memory_space<vmem>>, %arg2: memref<1x128xi32, #tpu.memory_space<vmem>>, %arg3: memref<64x128xf32, #tpu.memory_space<vmem>>, %arg4: memref<64x256xf32, #tpu.memory_space<vmem>>, %arg5: memref<32x32xf32, #tpu.memory_space<vmem>>, %arg6: memref<32x32xf32, #tpu.memory_space<vmem>>, %arg7: memref<32x1xf32, #tpu.memory_space<vmem>>, %arg8: memref<16x32xf32, #tpu.memory_space<vmem>>, %arg9: memref<16x1xf32, #tpu.memory_space<vmem>>, %arg10: memref<8x16xf32, #tpu.memory_space<vmem>>, %arg11: memref<8x1xf32, #tpu.memory_space<vmem>>, %arg12: memref<8x1xf32, #tpu.memory_space<vmem>>, %arg13: memref<32x1xf32, #tpu.memory_space<vmem>>, %arg14: memref<1x1xf32, #tpu.memory_space<vmem>>, %arg15: memref<1x128xf32, #tpu.memory_space<vmem>>) attributes {dimension_semantics = [#tpu.dimension_semantics<parallel>], iteration_bounds = array<i64: 2>, scalar_prefetch = 0 : i64, scratch_operands = 0 : i64, tpu.core_type = #tpu.core_type<tc>, window_params = [{transform_indices = @transform_0, window_bounds = array<i64: 1, 128>}, {transform_indices = @transform_1, window_bounds = array<i64: 1, 128>}, {pipeline_mode = #tpu.pipeline_mode<synchronous>, transform_indices = @transform_2, window_bounds = array<i64: 64, 128>}, {pipeline_mode = #tpu.pipeline_mode<synchronous>, transform_indices = @transform_3, window_bounds = array<i64: 64, 256>}, {pipeline_mode = #tpu.pipeline_mode<synchronous>, transform_indices = @transform_4, window_bounds = array<i64: 32, 32>}, {pipeline_mode = #tpu.pipeline_mode<synchronous>, transform_indices = @transform_5, window_bounds = array<i64: 32, 32>}, {pipeline_mode = #tpu.pipeline_mode<synchronous>, transform_indices = @transform_6, window_bounds = array<i64: 32, 1>}, {pipeline_mode = #tpu.pipeline_mode<synchronous>, transform_indices = @transform_7, window_bounds = array<i64: 16, 32>}, {pipeline_mode = #tpu.pipeline_mode<synchronous>, transform_indices = @transform_8, window_bounds = array<i64: 16, 1>}, {pipeline_mode = #tpu.pipeline_mode<synchronous>, transform_indices = @transform_9, window_bounds = array<i64: 8, 16>}, {pipeline_mode = #tpu.pipeline_mode<synchronous>, transform_indices = @transform_10, window_bounds = array<i64: 8, 1>}, {pipeline_mode = #tpu.pipeline_mode<synchronous>, transform_indices = @transform_11, window_bounds = array<i64: 8, 1>}, {pipeline_mode = #tpu.pipeline_mode<synchronous>, transform_indices = @transform_12, window_bounds = array<i64: 32, 1>}, {pipeline_mode = #tpu.pipeline_mode<synchronous>, transform_indices = @transform_13, window_bounds = array<i64: 1, 1>}, {transform_indices = @transform_14, window_bounds = array<i64: 1, 128>}]} {
    %0 = tpu.iota {dimensions = array<i32: 0>} : vector<128x128xi32>
    %c0 = arith.constant 0 : index
    %c0_0 = arith.constant 0 : index
    %1 = vector.load %arg1[%c0, %c0_0] : memref<1x128xi32, #tpu.memory_space<vmem>>, vector<1x128xi32>
    %2 = vector.broadcast %1 : vector<1x128xi32> to vector<128x128xi32>
    %3 = arith.cmpi eq, %0, %2 : vector<128x128xi32>
    %cst = arith.constant 1.000000e+00 : f32
    %cst_1 = arith.constant 0.000000e+00 : f32
    %4 = vector.broadcast %cst : f32 to vector<128x128xf32>
    %5 = vector.broadcast %cst_1 : f32 to vector<128x128xf32>
    %6 = arith.select %3, %4, %5 : vector<128x128xi1>, vector<128x128xf32>
    %7 = tpu.iota {dimensions = array<i32: 0>} : vector<256x128xi32>
    %c0_2 = arith.constant 0 : index
    %c0_3 = arith.constant 0 : index
    %8 = vector.load %arg2[%c0_2, %c0_3] : memref<1x128xi32, #tpu.memory_space<vmem>>, vector<1x128xi32>
    %9 = vector.broadcast %8 : vector<1x128xi32> to vector<256x128xi32>
    %10 = arith.cmpi eq, %7, %9 : vector<256x128xi32>
    %cst_4 = arith.constant 1.000000e+00 : f32
    %cst_5 = arith.constant 0.000000e+00 : f32
    %11 = vector.broadcast %cst_4 : f32 to vector<256x128xf32>
    %12 = vector.broadcast %cst_5 : f32 to vector<256x128xf32>
    %13 = arith.select %10, %11, %12 : vector<256x128xi1>, vector<256x128xf32>
    %c0_6 = arith.constant 0 : index
    %c0_7 = arith.constant 0 : index
    %14 = vector.load %arg3[%c0_6, %c0_7] : memref<64x128xf32, #tpu.memory_space<vmem>>, vector<64x128xf32>
    %cst_8 = arith.constant dense<0.000000e+00> : vector<64x128xf32>
    %15 = tpu.matmul %14, %6, %cst_8 {dimension_numbers = #tpu.dot_dimension_numbers<[1], [0], [0], [1], [0, 0, 1, 1], [], []>} : vector<64x128xf32>, vector<128x128xf32>, vector<64x128xf32> -> vector<64x128xf32>
    %c0_9 = arith.constant 0 : index
    %c0_10 = arith.constant 0 : index
    %16 = vector.load %arg4[%c0_9, %c0_10] : memref<64x256xf32, #tpu.memory_space<vmem>>, vector<64x256xf32>
    %cst_11 = arith.constant dense<0.000000e+00> : vector<64x128xf32>
    %17 = tpu.matmul %16, %13, %cst_11 {dimension_numbers = #tpu.dot_dimension_numbers<[1], [0], [0], [1], [0, 0, 1, 1], [], []>} : vector<64x256xf32>, vector<256x128xf32>, vector<64x128xf32> -> vector<64x128xf32>
    %18 = vector.extract_strided_slice %15 {offsets = [0, 0], sizes = [32, 128], strides = [1, 1]} : vector<64x128xf32> to vector<32x128xf32>
    %19 = vector.extract_strided_slice %17 {offsets = [0, 0], sizes = [32, 128], strides = [1, 1]} : vector<64x128xf32> to vector<32x128xf32>
    %20 = arith.mulf %18, %19 : vector<32x128xf32>
    %c0_12 = arith.constant 0 : index
    %c0_13 = arith.constant 0 : index
    %21 = vector.load %arg5[%c0_12, %c0_13] : memref<32x32xf32, #tpu.memory_space<vmem>>, vector<32x32xf32>
    %22 = vector.extract_strided_slice %15 {offsets = [32, 0], sizes = [32, 128], strides = [1, 1]} : vector<64x128xf32> to vector<32x128xf32>
    %cst_14 = arith.constant dense<0.000000e+00> : vector<32x128xf32>
    %23 = tpu.matmul %21, %22, %cst_14 {dimension_numbers = #tpu.dot_dimension_numbers<[1], [0], [0], [1], [0, 0, 1, 1], [], []>} : vector<32x32xf32>, vector<32x128xf32>, vector<32x128xf32> -> vector<32x128xf32>
    %c0_15 = arith.constant 0 : index
    %c0_16 = arith.constant 0 : index
    %24 = vector.load %arg6[%c0_15, %c0_16] : memref<32x32xf32, #tpu.memory_space<vmem>>, vector<32x32xf32>
    %25 = vector.extract_strided_slice %17 {offsets = [32, 0], sizes = [32, 128], strides = [1, 1]} : vector<64x128xf32> to vector<32x128xf32>
    %cst_17 = arith.constant dense<0.000000e+00> : vector<32x128xf32>
    %26 = tpu.matmul %24, %25, %cst_17 {dimension_numbers = #tpu.dot_dimension_numbers<[1], [0], [0], [1], [0, 0, 1, 1], [], []>} : vector<32x32xf32>, vector<32x128xf32>, vector<32x128xf32> -> vector<32x128xf32>
    %27 = arith.addf %23, %26 : vector<32x128xf32>
    %c0_18 = arith.constant 0 : index
    %c0_19 = arith.constant 0 : index
    %28 = vector.load %arg7[%c0_18, %c0_19] : memref<32x1xf32, #tpu.memory_space<vmem>>, vector<32x1xf32>
    %29 = vector.broadcast %28 : vector<32x1xf32> to vector<32x128xf32>
    %30 = arith.addf %27, %29 : vector<32x128xf32>
    %cst_20 = arith.constant 0.000000e+00 : f32
    %31 = vector.broadcast %cst_20 : f32 to vector<32x128xf32>
    %32 = arith.maximumf %30, %31 : vector<32x128xf32>
    %c0_21 = arith.constant 0 : index
    %c0_22 = arith.constant 0 : index
    %33 = vector.load %arg8[%c0_21, %c0_22] : memref<16x32xf32, #tpu.memory_space<vmem>>, vector<16x32xf32>
    %cst_23 = arith.constant dense<0.000000e+00> : vector<16x128xf32>
    %34 = tpu.matmul %33, %32, %cst_23 {dimension_numbers = #tpu.dot_dimension_numbers<[1], [0], [0], [1], [0, 0, 1, 1], [], []>} : vector<16x32xf32>, vector<32x128xf32>, vector<16x128xf32> -> vector<16x128xf32>
    %c0_24 = arith.constant 0 : index
    %c0_25 = arith.constant 0 : index
    %35 = vector.load %arg9[%c0_24, %c0_25] : memref<16x1xf32, #tpu.memory_space<vmem>>, vector<16x1xf32>
    %36 = vector.broadcast %35 : vector<16x1xf32> to vector<16x128xf32>
    %37 = arith.addf %34, %36 : vector<16x128xf32>
    %cst_26 = arith.constant 0.000000e+00 : f32
    %38 = vector.broadcast %cst_26 : f32 to vector<16x128xf32>
    %39 = arith.maximumf %37, %38 : vector<16x128xf32>
    %c0_27 = arith.constant 0 : index
    %c0_28 = arith.constant 0 : index
    %40 = vector.load %arg10[%c0_27, %c0_28] : memref<8x16xf32, #tpu.memory_space<vmem>>, vector<8x16xf32>
    %cst_29 = arith.constant dense<0.000000e+00> : vector<8x128xf32>
    %41 = tpu.matmul %40, %39, %cst_29 {dimension_numbers = #tpu.dot_dimension_numbers<[1], [0], [0], [1], [0, 0, 1, 1], [], []>} : vector<8x16xf32>, vector<16x128xf32>, vector<8x128xf32> -> vector<8x128xf32>
    %c0_30 = arith.constant 0 : index
    %c0_31 = arith.constant 0 : index
    %42 = vector.load %arg11[%c0_30, %c0_31] : memref<8x1xf32, #tpu.memory_space<vmem>>, vector<8x1xf32>
    %43 = vector.broadcast %42 : vector<8x1xf32> to vector<8x128xf32>
    %44 = arith.addf %41, %43 : vector<8x128xf32>
    %c0_32 = arith.constant 0 : index
    %c0_33 = arith.constant 0 : index
    %45 = vector.load %arg12[%c0_32, %c0_33] : memref<8x1xf32, #tpu.memory_space<vmem>>, vector<8x1xf32>
    %46 = vector.broadcast %45 : vector<8x1xf32> to vector<8x128xf32>
    %47 = arith.mulf %46, %44 : vector<8x128xf32>
    %cst_34 = arith.constant dense<0.000000e+00> : vector<128xf32>
    %48 = vector.multi_reduction <add>, %47, %cst_34 [0] : vector<8x128xf32> to vector<128xf32>
    %49 = vector.shape_cast %48 : vector<128xf32> to vector<1x128xf32>
    %c0_35 = arith.constant 0 : index
    %c0_36 = arith.constant 0 : index
    %50 = vector.load %arg13[%c0_35, %c0_36] : memref<32x1xf32, #tpu.memory_space<vmem>>, vector<32x1xf32>
    %51 = vector.broadcast %50 : vector<32x1xf32> to vector<32x128xf32>
    %52 = arith.mulf %51, %20 : vector<32x128xf32>
    %cst_37 = arith.constant dense<0.000000e+00> : vector<128xf32>
    %53 = vector.multi_reduction <add>, %52, %cst_37 [0] : vector<32x128xf32> to vector<128xf32>
    %54 = vector.shape_cast %53 : vector<128xf32> to vector<1x128xf32>
    %55 = arith.addf %49, %54 : vector<1x128xf32>
    %c0_38 = arith.constant 0 : index
    %c0_39 = arith.constant 0 : index
    %56 = vector.load %arg14[%c0_38, %c0_39] : memref<1x1xf32, #tpu.memory_space<vmem>>, vector<1x1xf32>
    %57 = vector.broadcast %56 : vector<1x1xf32> to vector<1x128xf32>
    %58 = arith.addf %55, %57 : vector<1x128xf32>
    %59 = arith.negf %58 : vector<1x128xf32>
    %60 = math.exp %59 : vector<1x128xf32>
    %cst_40 = arith.constant 1.000000e+00 : f32
    %61 = vector.broadcast %cst_40 : f32 to vector<1x128xf32>
    %62 = arith.addf %61, %60 : vector<1x128xf32>
    %63 = arith.divf %61, %62 : vector<1x128xf32>
    %c0_41 = arith.constant 0 : index
    %c0_42 = arith.constant 0 : index
    %64 = vector.load %arg15[%c0_41, %c0_42] : memref<1x128xf32, #tpu.memory_space<vmem>>, vector<1x128xf32>
    tpu.vector_store %arg15[%c0_41, %c0_42], %63 {strides = array<i32>} : memref<1x128xf32, #tpu.memory_space<vmem>>, vector<1x128xf32>,
    return
  }
  func.func @transform_0(%arg0: i32) -> (i32, i32) {
    %c0_i32 = arith.constant 0 : i32
    %c0_i32_0 = arith.constant 0 : i32
    return %c0_i32, %arg0 : i32, i32
  }
  func.func @transform_1(%arg0: i32) -> (i32, i32) {
    %c0_i32 = arith.constant 0 : i32
    %c0_i32_0 = arith.constant 0 : i32
    return %c0_i32, %arg0 : i32, i32
  }
  func.func @transform_2(%arg0: i32) -> (i32, i32) {
    %c0_i32 = arith.constant 0 : i32
    %c0_i32_0 = arith.constant 0 : i32
    %c0_i32_1 = arith.constant 0 : i32
    return %c0_i32, %c0_i32_0 : i32, i32
  }
  func.func @transform_3(%arg0: i32) -> (i32, i32) {
    %c0_i32 = arith.constant 0 : i32
    %c0_i32_0 = arith.constant 0 : i32
    %c0_i32_1 = arith.constant 0 : i32
    return %c0_i32, %c0_i32_0 : i32, i32
  }
  func.func @transform_4(%arg0: i32) -> (i32, i32) {
    %c0_i32 = arith.constant 0 : i32
    %c0_i32_0 = arith.constant 0 : i32
    %c0_i32_1 = arith.constant 0 : i32
    return %c0_i32, %c0_i32_0 : i32, i32
  }
  func.func @transform_5(%arg0: i32) -> (i32, i32) {
    %c0_i32 = arith.constant 0 : i32
    %c0_i32_0 = arith.constant 0 : i32
    %c0_i32_1 = arith.constant 0 : i32
    return %c0_i32, %c0_i32_0 : i32, i32
  }
  func.func @transform_6(%arg0: i32) -> (i32, i32) {
    %c0_i32 = arith.constant 0 : i32
    %c0_i32_0 = arith.constant 0 : i32
    %c0_i32_1 = arith.constant 0 : i32
    return %c0_i32, %c0_i32_0 : i32, i32
  }
  func.func @transform_7(%arg0: i32) -> (i32, i32) {
    %c0_i32 = arith.constant 0 : i32
    %c0_i32_0 = arith.constant 0 : i32
    %c0_i32_1 = arith.constant 0 : i32
    return %c0_i32, %c0_i32_0 : i32, i32
  }
  func.func @transform_8(%arg0: i32) -> (i32, i32) {
    %c0_i32 = arith.constant 0 : i32
    %c0_i32_0 = arith.constant 0 : i32
    %c0_i32_1 = arith.constant 0 : i32
    return %c0_i32, %c0_i32_0 : i32, i32
  }
  func.func @transform_9(%arg0: i32) -> (i32, i32) {
    %c0_i32 = arith.constant 0 : i32
    %c0_i32_0 = arith.constant 0 : i32
    %c0_i32_1 = arith.constant 0 : i32
    return %c0_i32, %c0_i32_0 : i32, i32
  }
  func.func @transform_10(%arg0: i32) -> (i32, i32) {
    %c0_i32 = arith.constant 0 : i32
    %c0_i32_0 = arith.constant 0 : i32
    %c0_i32_1 = arith.constant 0 : i32
    return %c0_i32, %c0_i32_0 : i32, i32
  }
  func.func @transform_11(%arg0: i32) -> (i32, i32) {
    %c0_i32 = arith.constant 0 : i32
    %c0_i32_0 = arith.constant 0 : i32
    %c0_i32_1 = arith.constant 0 : i32
    return %c0_i32, %c0_i32_0 : i32, i32
  }
  func.func @transform_12(%arg0: i32) -> (i32, i32) {
    %c0_i32 = arith.constant 0 : i32
    %c0_i32_0 = arith.constant 0 : i32
    %c0_i32_1 = arith.constant 0 : i32
    return %c0_i32, %c0_i32_0 : i32, i32
  }
  func.func @transform_13(%arg0: i32) -> (i32, i32) {
    %c0_i32 = arith.constant 0 : i32
    %c0_i32_0 = arith.constant 0 : i32
    %c0_i32_1 = arith.constant 0 : i32
    return %c0_i32, %c0_i32_0 : i32, i32
  }
  func.func @transform_14(%arg0: i32) -> (i32, i32) {
    %c0_i32 = arith.constant 0 : i32
    %c0_i32_0 = arith.constant 0 : i32
    return %c0_i32, %arg0 : i32, i32
  }
}

</mosaic_0001>

<llo_original>
// kernel: tpu_custom_call.1
$region0: #{tpu_custom_call.1}
  #allocation0 [shape = 'u32[]', space=smem, size = 0x4, offset = 0x4, fixed_abs, tag = 'smem constant byte address 0x4 - core index']
  #allocation1 [shape = 'u32[144,128]{1,0:T(1,128)}', space=vmem, size = 0x12000, scoped, tag = 'internal scratch']
  #allocation2 [shape = 'f32[1,1]{1,0:T(1,128)S(1)}', space=vmem, size = 0x200, scoped, tag = 'scoped memory for tpu_custom_call.1']
  %s0 = inlined_call_operand.hbm [shape: s32[1,256], index: 0, kind: input, shape index: {}]
  %s1 = inlined_call_operand.hbm [shape: s32[1,256], index: 1, kind: input, shape index: {}]
  %s2 = inlined_call_operand.vmem [shape: f32[64,128], index: 2, kind: input, shape index: {}]
  %s3 = inlined_call_operand.hbm [shape: f32[64,256], index: 3, kind: input, shape index: {}]
  %s4 = inlined_call_operand.vmem [shape: f32[32,32], index: 4, kind: input, shape index: {}]
  %s5 = inlined_call_operand.hbm [shape: f32[32,32], index: 5, kind: input, shape index: {}]
  %s6 = inlined_call_operand.vmem [shape: f32[32,1], index: 6, kind: input, shape index: {}]
  %s7 = inlined_call_operand.vmem [shape: f32[16,32], index: 7, kind: input, shape index: {}]
  %s8 = inlined_call_operand.vmem [shape: f32[16,1], index: 8, kind: input, shape index: {}]
  %s9 = inlined_call_operand.vmem [shape: f32[8,16], index: 9, kind: input, shape index: {}]
  %s10 = inlined_call_operand.vmem [shape: f32[8,1], index: 10, kind: input, shape index: {}]
  %s11 = inlined_call_operand.vmem [shape: f32[8,1], index: 11, kind: input, shape index: {}]
  %s12 = inlined_call_operand.vmem [shape: f32[32,1], index: 12, kind: input, shape index: {}]
  %s13 = inlined_call_operand.<no memory space> [shape: f32[1,1], index: 13, kind: input, shape index: {}]
  %s14 = inlined_call_operand.hbm [shape: f32[1,256], index: 14, kind: output, shape index: {}]
  %s15 = sld [smem:[#allocation0]]
  $region105: #{tpu_custom_call.1} parent=0
    _
  %s17 = ssub.s32 1, %s15
  %s18 = scalar_select 0, %s17, %s15
  %v19 = vstv %s13
  %20 = vst [vmem:[#allocation2] sm:$0x1] %v19
  $region1: #{tpu_custom_call.1} parent=0
    #allocation3 [shape = 'u8[1024]{0}', space=vmem, size = 0x400, scoped, tag = 'input window, operand 0']
    #allocation4 [shape = 's32[2]{0}', space=sflag, size = 0x8, scoped, tag = 'scoped memory for tpu_custom_call.1']
    #allocation5 [shape = 's32[2]{0}', space=sflag, size = 0x8, scoped, tag = 'scoped memory for tpu_custom_call.1']
    #allocation6 [shape = 'u8[1024]{0}', space=vmem, size = 0x400, scoped, tag = 'input window, operand 1']
    #allocation7 [shape = 's32[2]{0}', space=sflag, size = 0x8, scoped, tag = 'scoped memory for tpu_custom_call.1']
    #allocation8 [shape = 'u8[65536]{0}', space=vmem, size = 0x10000, scoped, tag = 'input window, operand 3, single buffered']
    #allocation9 [shape = 'u8[16384]{0}', space=vmem, size = 0x4000, scoped, tag = 'input window, operand 5, single buffered']
    #allocation10 [shape = 's32[1]{0}', space=sflag, size = 0x4, scoped, tag = 'scoped memory for tpu_custom_call.1']
    #allocation11 [shape = 'u8[1024]{0}', space=vmem, size = 0x400, scoped, tag = 'output window, operand 0']
    %21 = vsyncpa [#allocation4], 0
    %s22 = scalar_lea.sflag [#allocation4], 1
    %23 = vsyncpa %s22, 0
    %24 = vsyncpa [#allocation7], 0
    %s25 = scalar_lea.sflag [#allocation7], 1
    %26 = vsyncpa %s25, 0
    %27 = vsyncpa [#allocation10], 0
    %28 = vsyncpa [#allocation5], 0
    %s29 = scalar_lea.sflag [#allocation5], 1
    %30 = vsyncpa %s29, 0
    loop: start=0, step=1, limit=4
    $region2: #{tpu_custom_call.1} parent=1 // loop_pre_header
      _
    $region3: #{tpu_custom_call.1} parent=1 // loop_header
      %s32 = sphi 0, %s36
      %p33 = scmp.ge.s32.totalorder %s32, 4
      %s42 = sphi 0, %s44
      %s45 = sphi 0, %s42
      %s46 = sphi 0, %s45
      %s62 = sphi 0, %s46
      %s68 = sphi 0, %s70
      %s71 = sphi 0, %s68
      %s72 = sphi 0, %s71
      %s88 = sphi 0, %s72
      %s92 = sphi 0, %s92
      %s94 = sphi 0, %s92
      %s95 = sphi 0, %s94
      %s109 = sphi 0, %s95
      %s113 = sphi 0, %s113
      %s115 = sphi 0, %s113
      %s116 = sphi 0, %s115
      %s130 = sphi 0, %s116
      %s134 = sphi 0, %s134
      %s136 = sphi 0, %s134
      %s137 = sphi 0, %s136
      %s151 = sphi 0, %s137
      %s155 = sphi 0, %s155
      %s157 = sphi 0, %s155
      %s158 = sphi 0, %s157
      %s172 = sphi 0, %s158
      %s176 = sphi 0, %s176
      %s178 = sphi 0, %s176
      %s179 = sphi 0, %s178
      %s193 = sphi 0, %s179
      %s197 = sphi 0, %s197
      %s199 = sphi 0, %s197
      %s200 = sphi 0, %s199
      %s214 = sphi 0, %s200
      %s218 = sphi 0, %s218
      %s220 = sphi 0, %s218
      %s221 = sphi 0, %s220
      %s235 = sphi 0, %s221
      %s239 = sphi 0, %s239
      %s241 = sphi 0, %s239
      %s242 = sphi 0, %s241
      %s256 = sphi 0, %s242
      %s260 = sphi 0, %s260
      %s262 = sphi 0, %s260
      %s263 = sphi 0, %s262
      %s277 = sphi 0, %s263
      %s281 = sphi 0, %s281
      %s283 = sphi 0, %s281
      %s284 = sphi 0, %s283
      %s298 = sphi 0, %s284
      %s302 = sphi 0, %s302
      %s304 = sphi 0, %s302
      %s305 = sphi 0, %s304
      %s319 = sphi 0, %s305
      %s323 = sphi 0, %s323
      %s325 = sphi 0, %s323
      %s326 = sphi 0, %s325
      %s340 = sphi 0, %s326
      %s346 = sphi 0, %s348
      %s349 = sphi 0, %s346
      %s350 = sphi 0, %s349
      %s366 = sphi 0, %s350
    $region4: #{tpu_custom_call.1} parent=1 // loop_header_branch
      %35 = sbr.rel (%p33) target = $region8
    $region5: #{tpu_custom_call.1} parent=1 // loop_body
      %s37 = ssub.s32 %s32, 1
      %s38 = ssub.s32 %s32, 2
      %s39 = sadd.s32 %s32, 1
      %s40 = ssub.s32 %s32, %s39
      %p41 = scmp.eq.s32.totalorder %s40, 0
      %s43 = sadd.s32 %s42, 1
      %s44 = scalar_select %p41, %s42, %s43
      %p47 = pneg %p41
      %p48 = scmp.eq.s32.totalorder %s32, 1
      %p49 = por %p47, %p48
      %p50 = scmp.ne.s32.totalorder %s42, %s45
      %p51 = scmp.eq.s32.totalorder %s32, 0
      %p52 = por %p50, %p51
      %p53 = scmp.ne.s32.totalorder %s42, %s45
      %p54 = scmp.eq.s32.totalorder %s37, 1
      %p55 = por %p53, %p54
      %p56 = scmp.ne.s32.totalorder %s45, %s46
      %p57 = scmp.eq.s32.totalorder %s37, 0
      %p58 = por %p56, %p57
      %p59 = scmp.ne.s32.totalorder %s45, %s46
      %p60 = scmp.eq.s32.totalorder %s38, 1
      %p61 = por %p59, %p60
      %p63 = scmp.ne.s32.totalorder %s46, %s62
      %p64 = scmp.eq.s32.totalorder %s38, 0
      %p65 = por %p63, %p64
      %s66 = ssub.s32 %s32, %s39
      %p67 = scmp.eq.s32.totalorder %s66, 0
      %s69 = sadd.s32 %s68, 1
      %s70 = scalar_select %p67, %s68, %s69
      %p73 = pneg %p67
      %p74 = scmp.eq.s32.totalorder %s32, 1
      %p75 = por %p73, %p74
      %p76 = scmp.ne.s32.totalorder %s68, %s71
      %p77 = scmp.eq.s32.totalorder %s32, 0
      %p78 = por %p76, %p77
      %p79 = scmp.ne.s32.totalorder %s68, %s71
      %p80 = scmp.eq.s32.totalorder %s37, 1
      %p81 = por %p79, %p80
      %p82 = scmp.ne.s32.totalorder %s71, %s72
      %p83 = scmp.eq.s32.totalorder %s37, 0
      %p84 = por %p82, %p83
      %p85 = scmp.ne.s32.totalorder %s71, %s72
      %p86 = scmp.eq.s32.totalorder %s38, 1
      %p87 = por %p85, %p86
      %p89 = scmp.ne.s32.totalorder %s72, %s88
      %p90 = scmp.eq.s32.totalorder %s38, 0
      %p91 = por %p89, %p90
      %s93 = sadd.s32 %s92, 1
      %p96 = scmp.eq.s32.totalorder %s32, 1
      %p97 = scmp.ne.s32.totalorder %s92, %s94
      %p98 = scmp.eq.s32.totalorder %s32, 0
      %p99 = por %p97, %p98
      %p100 = scmp.ne.s32.totalorder %s92, %s94
      %p101 = scmp.eq.s32.totalorder %s37, 1
      %p102 = por %p100, %p101
      %p103 = scmp.ne.s32.totalorder %s94, %s95
      %p104 = scmp.eq.s32.totalorder %s37, 0
      %p105 = por %p103, %p104
      %p106 = scmp.ne.s32.totalorder %s94, %s95
      %p107 = scmp.eq.s32.totalorder %s38, 1
      %p108 = por %p106, %p107
      %p110 = scmp.ne.s32.totalorder %s95, %s109
      %p111 = scmp.eq.s32.totalorder %s38, 0
      %p112 = por %p110, %p111
      %s114 = sadd.s32 %s113, 1
      %p117 = scmp.eq.s32.totalorder %s32, 1
      %p118 = scmp.ne.s32.totalorder %s113, %s115
      %p119 = scmp.eq.s32.totalorder %s32, 0
      %p120 = por %p118, %p119
      %p121 = scmp.ne.s32.totalorder %s113, %s115
      %p122 = scmp.eq.s32.totalorder %s37, 1
      %p123 = por %p121, %p122
      %p124 = scmp.ne.s32.totalorder %s115, %s116
      %p125 = scmp.eq.s32.totalorder %s37, 0
      %p126 = por %p124, %p125
      %p127 = scmp.ne.s32.totalorder %s115, %s116
      %p128 = scmp.eq.s32.totalorder %s38, 1
      %p129 = por %p127, %p128
      %p131 = scmp.ne.s32.totalorder %s116, %s130
      %p132 = scmp.eq.s32.totalorder %s38, 0
      %p133 = por %p131, %p132
      %s135 = sadd.s32 %s134, 1
      %p138 = scmp.eq.s32.totalorder %s32, 1
      %p139 = scmp.ne.s32.totalorder %s134, %s136
      %p140 = scmp.eq.s32.totalorder %s32, 0
      %p141 = por %p139, %p140
      %p142 = scmp.ne.s32.totalorder %s134, %s136
      %p143 = scmp.eq.s32.totalorder %s37, 1
      %p144 = por %p142, %p143
      %p145 = scmp.ne.s32.totalorder %s136, %s137
      %p146 = scmp.eq.s32.totalorder %s37, 0
      %p147 = por %p145, %p146
      %p148 = scmp.ne.s32.totalorder %s136, %s137
      %p149 = scmp.eq.s32.totalorder %s38, 1
      %p150 = por %p148, %p149
      %p152 = scmp.ne.s32.totalorder %s137, %s151
      %p153 = scmp.eq.s32.totalorder %s38, 0
      %p154 = por %p152, %p153
      %s156 = sadd.s32 %s155, 1
      %p159 = scmp.eq.s32.totalorder %s32, 1
      %p160 = scmp.ne.s32.totalorder %s155, %s157
      %p161 = scmp.eq.s32.totalorder %s32, 0
      %p162 = por %p160, %p161
      %p163 = scmp.ne.s32.totalorder %s155, %s157
      %p164 = scmp.eq.s32.totalorder %s37, 1
      %p165 = por %p163, %p164
      %p166 = scmp.ne.s32.totalorder %s157, %s158
      %p167 = scmp.eq.s32.totalorder %s37, 0
      %p168 = por %p166, %p167
      %p169 = scmp.ne.s32.totalorder %s157, %s158
      %p170 = scmp.eq.s32.totalorder %s38, 1
      %p171 = por %p169, %p170
      %p173 = scmp.ne.s32.totalorder %s158, %s172
      %p174 = scmp.eq.s32.totalorder %s38, 0
      %p175 = por %p173, %p174
      %s177 = sadd.s32 %s176, 1
      %p180 = scmp.eq.s32.totalorder %s32, 1
      %p181 = scmp.ne.s32.totalorder %s176, %s178
      %p182 = scmp.eq.s32.totalorder %s32, 0
      %p183 = por %p181, %p182
      %p184 = scmp.ne.s32.totalorder %s176, %s178
      %p185 = scmp.eq.s32.totalorder %s37, 1
      %p186 = por %p184, %p185
      %p187 = scmp.ne.s32.totalorder %s178, %s179
      %p188 = scmp.eq.s32.totalorder %s37, 0
      %p189 = por %p187, %p188
      %p190 = scmp.ne.s32.totalorder %s178, %s179
      %p191 = scmp.eq.s32.totalorder %s38, 1
      %p192 = por %p190, %p191
      %p194 = scmp.ne.s32.totalorder %s179, %s193
      %p195 = scmp.eq.s32.totalorder %s38, 0
      %p196 = por %p194, %p195
      %s198 = sadd.s32 %s197, 1
      %p201 = scmp.eq.s32.totalorder %s32, 1
      %p202 = scmp.ne.s32.totalorder %s197, %s199
      %p203 = scmp.eq.s32.totalorder %s32, 0
      %p204 = por %p202, %p203
      %p205 = scmp.ne.s32.totalorder %s197, %s199
      %p206 = scmp.eq.s32.totalorder %s37, 1
      %p207 = por %p205, %p206
      %p208 = scmp.ne.s32.totalorder %s199, %s200
      %p209 = scmp.eq.s32.totalorder %s37, 0
      %p210 = por %p208, %p209
      %p211 = scmp.ne.s32.totalorder %s199, %s200
      %p212 = scmp.eq.s32.totalorder %s38, 1
      %p213 = por %p211, %p212
      %p215 = scmp.ne.s32.totalorder %s200, %s214
      %p216 = scmp.eq.s32.totalorder %s38, 0
      %p217 = por %p215, %p216
      %s219 = sadd.s32 %s218, 1
      %p222 = scmp.eq.s32.totalorder %s32, 1
      %p223 = scmp.ne.s32.totalorder %s218, %s220
      %p224 = scmp.eq.s32.totalorder %s32, 0
      %p225 = por %p223, %p224
      %p226 = scmp.ne.s32.totalorder %s218, %s220
      %p227 = scmp.eq.s32.totalorder %s37, 1
      %p228 = por %p226, %p227
      %p229 = scmp.ne.s32.totalorder %s220, %s221
      %p230 = scmp.eq.s32.totalorder %s37, 0
      %p231 = por %p229, %p230
      %p232 = scmp.ne.s32.totalorder %s220, %s221
      %p233 = scmp.eq.s32.totalorder %s38, 1
      %p234 = por %p232, %p233
      %p236 = scmp.ne.s32.totalorder %s221, %s235
      %p237 = scmp.eq.s32.totalorder %s38, 0
      %p238 = por %p236, %p237
      %s240 = sadd.s32 %s239, 1
      %p243 = scmp.eq.s32.totalorder %s32, 1
      %p244 = scmp.ne.s32.totalorder %s239, %s241
      %p245 = scmp.eq.s32.totalorder %s32, 0
      %p246 = por %p244, %p245
      %p247 = scmp.ne.s32.totalorder %s239, %s241
      %p248 = scmp.eq.s32.totalorder %s37, 1
      %p249 = por %p247, %p248
      %p250 = scmp.ne.s32.totalorder %s241, %s242
      %p251 = scmp.eq.s32.totalorder %s37, 0
      %p252 = por %p250, %p251
      %p253 = scmp.ne.s32.totalorder %s241, %s242
      %p254 = scmp.eq.s32.totalorder %s38, 1
      %p255 = por %p253, %p254
      %p257 = scmp.ne.s32.totalorder %s242, %s256
      %p258 = scmp.eq.s32.totalorder %s38, 0
      %p259 = por %p257, %p258
      %s261 = sadd.s32 %s260, 1
      %p264 = scmp.eq.s32.totalorder %s32, 1
      %p265 = scmp.ne.s32.totalorder %s260, %s262
      %p266 = scmp.eq.s32.totalorder %s32, 0
      %p267 = por %p265, %p266
      %p268 = scmp.ne.s32.totalorder %s260, %s262
      %p269 = scmp.eq.s32.totalorder %s37, 1
      %p270 = por %p268, %p269
      %p271 = scmp.ne.s32.totalorder %s262, %s263
      %p272 = scmp.eq.s32.totalorder %s37, 0
      %p273 = por %p271, %p272
      %p274 = scmp.ne.s32.totalorder %s262, %s263
      %p275 = scmp.eq.s32.totalorder %s38, 1
      %p276 = por %p274, %p275
      %p278 = scmp.ne.s32.totalorder %s263, %s277
      %p279 = scmp.eq.s32.totalorder %s38, 0
      %p280 = por %p278, %p279
      %s282 = sadd.s32 %s281, 1
      %p285 = scmp.eq.s32.totalorder %s32, 1
      %p286 = scmp.ne.s32.totalorder %s281, %s283
      %p287 = scmp.eq.s32.totalorder %s32, 0
      %p288 = por %p286, %p287
      %p289 = scmp.ne.s32.totalorder %s281, %s283
      %p290 = scmp.eq.s32.totalorder %s37, 1
      %p291 = por %p289, %p290
      %p292 = scmp.ne.s32.totalorder %s283, %s284
      %p293 = scmp.eq.s32.totalorder %s37, 0
      %p294 = por %p292, %p293
      %p295 = scmp.ne.s32.totalorder %s283, %s284
      %p296 = scmp.eq.s32.totalorder %s38, 1
      %p297 = por %p295, %p296
      %p299 = scmp.ne.s32.totalorder %s284, %s298
      %p300 = scmp.eq.s32.totalorder %s38, 0
      %p301 = por %p299, %p300
      %s303 = sadd.s32 %s302, 1
      %p306 = scmp.eq.s32.totalorder %s32, 1
      %p307 = scmp.ne.s32.totalorder %s302, %s304
      %p308 = scmp.eq.s32.totalorder %s32, 0
      %p309 = por %p307, %p308
      %p310 = scmp.ne.s32.totalorder %s302, %s304
      %p311 = scmp.eq.s32.totalorder %s37, 1
      %p312 = por %p310, %p311
      %p313 = scmp.ne.s32.totalorder %s304, %s305
      %p314 = scmp.eq.s32.totalorder %s37, 0
      %p315 = por %p313, %p314
      %p316 = scmp.ne.s32.totalorder %s304, %s305
      %p317 = scmp.eq.s32.totalorder %s38, 1
      %p318 = por %p316, %p317
      %p320 = scmp.ne.s32.totalorder %s305, %s319
      %p321 = scmp.eq.s32.totalorder %s38, 0
      %p322 = por %p320, %p321
      %s324 = sadd.s32 %s323, 1
      %p327 = scmp.eq.s32.totalorder %s32, 1
      %p328 = scmp.ne.s32.totalorder %s323, %s325
      %p329 = scmp.eq.s32.totalorder %s32, 0
      %p330 = por %p328, %p329
      %p331 = scmp.ne.s32.totalorder %s323, %s325
      %p332 = scmp.eq.s32.totalorder %s37, 1
      %p333 = por %p331, %p332
      %p334 = scmp.ne.s32.totalorder %s325, %s326
      %p335 = scmp.eq.s32.totalorder %s37, 0
      %p336 = por %p334, %p335
      %p337 = scmp.ne.s32.totalorder %s325, %s326
      %p338 = scmp.eq.s32.totalorder %s38, 1
      %p339 = por %p337, %p338
      %p341 = scmp.ne.s32.totalorder %s326, %s340
      %p342 = scmp.eq.s32.totalorder %s38, 0
      %p343 = por %p341, %p342
      %s344 = ssub.s32 %s32, %s39
      %p345 = scmp.eq.s32.totalorder %s344, 0
      %s347 = sadd.s32 %s346, 1
      %s348 = scalar_select %p345, %s346, %s347
      %p351 = pneg %p345
      %p352 = scmp.eq.s32.totalorder %s32, 1
      %p353 = por %p351, %p352
      %p354 = scmp.ne.s32.totalorder %s346, %s349
      %p355 = scmp.eq.s32.totalorder %s32, 0
      %p356 = por %p354, %p355
      %p357 = scmp.ne.s32.totalorder %s346, %s349
      %p358 = scmp.eq.s32.totalorder %s37, 1
      %p359 = por %p357, %p358
      %p360 = scmp.ne.s32.totalorder %s349, %s350
      %p361 = scmp.eq.s32.totalorder %s37, 0
      %p362 = por %p360, %p361
      %p363 = scmp.ne.s32.totalorder %s349, %s350
      %p364 = scmp.eq.s32.totalorder %s38, 1
      %p365 = por %p363, %p364
      %p367 = scmp.ne.s32.totalorder %s350, %s366
      %p368 = scmp.eq.s32.totalorder %s38, 0
      %p369 = por %p367, %p368
      %p370 = scmp.le.s32.totalorder 1, %s32
      %p371 = scmp.lt.s32.totalorder %s32, 3
      %p372 = pnand %p370, %p371
      %p373 = pneg %p372
      // Predicated region
      $region9: #{tpu_custom_call.1} parent=5 // pred_check
        _
      $region10: #{tpu_custom_call.1} parent=5 // pred_check_branch
        %375 = sbr.rel (%p372) target = $region12
      $region11: #{tpu_custom_call.1} parent=5 // pred_region
        %s376 = ssub.s32 %s32, 1
        // Predicated region
        $region13: #{tpu_custom_call.1} parent=11 // pred_check
          %p377 = pneg %p105
        $region14: #{tpu_custom_call.1} parent=11 // pred_check_branch
          %379 = sbr.rel (%p377) target = $region16
        $region15: #{tpu_custom_call.1} parent=11 // pred_region
          _
        $region16: #{tpu_custom_call.1} parent=11 // pred_fallthru
          _
        // Predicated region
        $region17: #{tpu_custom_call.1} parent=11 // pred_check
          %p380 = pneg %p126
        $region18: #{tpu_custom_call.1} parent=11 // pred_check_branch
          %382 = sbr.rel (%p380) target = $region20
        $region19: #{tpu_custom_call.1} parent=11 // pred_region
          %s384 = ssub.s32 2048, 2048
          %385 = vsyncadd [#allocation7], %s384
          %s386 = sshll.u32 [#allocation8], 4
          %s387 = int_to_ptr.vmem [resolvable:$true] %s386
          %392 = dma.hbm_to_vmem [thread:$0]  %s3, 2048, %s387, [#allocation7], 256, 256, 16
        $region20: #{tpu_custom_call.1} parent=11 // pred_fallthru
          _
        // Predicated region
        $region21: #{tpu_custom_call.1} parent=11 // pred_check
          %p393 = pneg %p147
        $region22: #{tpu_custom_call.1} parent=11 // pred_check_branch
          %395 = sbr.rel (%p393) target = $region24
        $region23: #{tpu_custom_call.1} parent=11 // pred_region
          _
        $region24: #{tpu_custom_call.1} parent=11 // pred_fallthru
          _
        // Predicated region
        $region25: #{tpu_custom_call.1} parent=11 // pred_check
          %p396 = pneg %p168
        $region26: #{tpu_custom_call.1} parent=11 // pred_check_branch
          %398 = sbr.rel (%p396) target = $region28
        $region27: #{tpu_custom_call.1} parent=11 // pred_region
          %s400 = ssub.s32 512, 512
          %401 = vsyncadd [#allocation10], %s400
          %s402 = sshll.u32 [#allocation9], 4
          %s403 = int_to_ptr.vmem [resolvable:$true] %s402
          %408 = dma.hbm_to_vmem [thread:$0]  %s5, 512, %s403, [#allocation10], 128, 128, 8
        $region28: #{tpu_custom_call.1} parent=11 // pred_fallthru
          _
        // Predicated region
        $region29: #{tpu_custom_call.1} parent=11 // pred_check
          %p409 = pneg %p189
        $region30: #{tpu_custom_call.1} parent=11 // pred_check_branch
          %411 = sbr.rel (%p409) target = $region32
        $region31: #{tpu_custom_call.1} parent=11 // pred_region
          _
        $region32: #{tpu_custom_call.1} parent=11 // pred_fallthru
          _
        // Predicated region
        $region33: #{tpu_custom_call.1} parent=11 // pred_check
          %p412 = pneg %p210
        $region34: #{tpu_custom_call.1} parent=11 // pred_check_branch
          %414 = sbr.rel (%p412) target = $region36
        $region35: #{tpu_custom_call.1} parent=11 // pred_region
          _
        $region36: #{tpu_custom_call.1} parent=11 // pred_fallthru
          _
        // Predicated region
        $region37: #{tpu_custom_call.1} parent=11 // pred_check
          %p415 = pneg %p231
        $region38: #{tpu_custom_call.1} parent=11 // pred_check_branch
          %417 = sbr.rel (%p415) target = $region40
        $region39: #{tpu_custom_call.1} parent=11 // pred_region
          _
        $region40: #{tpu_custom_call.1} parent=11 // pred_fallthru
          _
        // Predicated region
        $region41: #{tpu_custom_call.1} parent=11 // pred_check
          %p418 = pneg %p252
        $region42: #{tpu_custom_call.1} parent=11 // pred_check_branch
          %420 = sbr.rel (%p418) target = $region44
        $region43: #{tpu_custom_call.1} parent=11 // pred_region
          _
        $region44: #{tpu_custom_call.1} parent=11 // pred_fallthru
          _
        // Predicated region
        $region45: #{tpu_custom_call.1} parent=11 // pred_check
          %p421 = pneg %p273
        $region46: #{tpu_custom_call.1} parent=11 // pred_check_branch
          %423 = sbr.rel (%p421) target = $region48
        $region47: #{tpu_custom_call.1} parent=11 // pred_region
          _
        $region48: #{tpu_custom_call.1} parent=11 // pred_fallthru
          _
        // Predicated region
        $region49: #{tpu_custom_call.1} parent=11 // pred_check
          %p424 = pneg %p294
        $region50: #{tpu_custom_call.1} parent=11 // pred_check_branch
          %426 = sbr.rel (%p424) target = $region52
        $region51: #{tpu_custom_call.1} parent=11 // pred_region
          _
        $region52: #{tpu_custom_call.1} parent=11 // pred_fallthru
          _
        // Predicated region
        $region53: #{tpu_custom_call.1} parent=11 // pred_check
          %p427 = pneg %p315
        $region54: #{tpu_custom_call.1} parent=11 // pred_check_branch
          %429 = sbr.rel (%p427) target = $region56
        $region55: #{tpu_custom_call.1} parent=11 // pred_region
          _
        $region56: #{tpu_custom_call.1} parent=11 // pred_fallthru
          _
        // Predicated region
        $region57: #{tpu_custom_call.1} parent=11 // pred_check
          %p430 = pneg %p336
        $region58: #{tpu_custom_call.1} parent=11 // pred_check_branch
          %432 = sbr.rel (%p430) target = $region60
        $region59: #{tpu_custom_call.1} parent=11 // pred_region
          _
        $region60: #{tpu_custom_call.1} parent=11 // pred_fallthru
          _
      $region12: #{tpu_custom_call.1} parent=5 // pred_fallthru
        _
      %p433 = scmp.lt.s32.totalorder %s32, 2
      // Predicated region
      $region61: #{tpu_custom_call.1} parent=5 // pred_check
        %p434 = pneg %p433
      $region62: #{tpu_custom_call.1} parent=5 // pred_check_branch
        %436 = sbr.rel (%p434) target = $region64
      $region63: #{tpu_custom_call.1} parent=5 // pred_region
        // Predicated region
        $region65: #{tpu_custom_call.1} parent=63 // pred_check
          %p437 = pneg %p52
        $region66: #{tpu_custom_call.1} parent=63 // pred_check_branch
          %439 = sbr.rel (%p437) target = $region68
        $region67: #{tpu_custom_call.1} parent=63 // pred_region
          %s440 = sand.u32 %s42, 1
          %s441 = scalar_lea.sflag [#allocation4], %s440
          %s442 = sand.u32 %s42, 1
          %s443 = scalar_lea.vmem [#allocation3], %s442
          %s445 = ssub.s32 16, 16
          %446 = vsyncadd %s441, %s445
          %s447 = smul.addr %s32, 16
          %s448 = scalar_lea.hbm %s0, %s447
          %s450 = sshll.u32 %s443, 4
          %s451 = int_to_ptr.vmem [resolvable:$true] %s450
          %453 = dma.hbm_to_vmem [thread:$0]  %s448, 16, %s451, %s441
        $region68: #{tpu_custom_call.1} parent=63 // pred_fallthru
          _
        // Predicated region
        $region69: #{tpu_custom_call.1} parent=63 // pred_check
          %p454 = pneg %p78
        $region70: #{tpu_custom_call.1} parent=63 // pred_check_branch
          %456 = sbr.rel (%p454) target = $region72
        $region71: #{tpu_custom_call.1} parent=63 // pred_region
          %s457 = sand.u32 %s32, 1
          %s458 = scalar_lea.sflag [#allocation7], %s457
          %s459 = sand.u32 %s68, 1
          %s460 = scalar_lea.vmem [#allocation6], %s459
          %s462 = ssub.s32 16, 16
          %463 = vsyncadd %s458, %s462
          %s464 = smul.addr %s32, 16
          %s465 = scalar_lea.hbm %s1, %s464
          %s467 = sshll.u32 %s460, 4
          %s468 = int_to_ptr.vmem [resolvable:$true] %s467
          %470 = dma.hbm_to_vmem [thread:$0]  %s465, 16, %s468, %s458
        $region72: #{tpu_custom_call.1} parent=63 // pred_fallthru
          _
      $region64: #{tpu_custom_call.1} parent=5 // pred_fallthru
        _
      %p471 = scmp.le.s32.totalorder 1, %s32
      %p472 = scmp.lt.s32.totalorder %s32, 3
      %p473 = pnand %p471, %p472
      %p474 = pneg %p473
      // Predicated region
      $region73: #{tpu_custom_call.1} parent=5 // pred_check
        _
      $region74: #{tpu_custom_call.1} parent=5 // pred_check_branch
        %476 = sbr.rel (%p473) target = $region76
      $region75: #{tpu_custom_call.1} parent=5 // pred_region
        %s477 = ssub.s32 %s32, 1
        %s478 = sand.u32 %s45, 1
        %s479 = scalar_lea.sflag [#allocation4], %s478
        %s480 = sand.u32 %s45, 1
        %s481 = scalar_lea.vmem [#allocation3], %s480
        // Predicated region
        $region77: #{tpu_custom_call.1} parent=75 // pred_check
          %p482 = pneg %p58
        $region78: #{tpu_custom_call.1} parent=75 // pred_check_branch
          %484 = sbr.rel (%p482) target = $region80
        $region79: #{tpu_custom_call.1} parent=75 // pred_region
          %485 = dma.done %s479, 16
        $region80: #{tpu_custom_call.1} parent=75 // pred_fallthru
          _
        %s486 = sand.u32 %s37, 1
        %s487 = scalar_lea.sflag [#allocation7], %s486
        %s488 = sand.u32 %s71, 1
        %s489 = scalar_lea.vmem [#allocation6], %s488
        // Predicated region
        $region81: #{tpu_custom_call.1} parent=75 // pred_check
          %p490 = pneg %p84
        $region82: #{tpu_custom_call.1} parent=75 // pred_check_branch
          %492 = sbr.rel (%p490) target = $region84
        $region83: #{tpu_custom_call.1} parent=75 // pred_region
          %493 = dma.done %s487, 16
        $region84: #{tpu_custom_call.1} parent=75 // pred_fallthru
          _
        // Predicated region
        $region85: #{tpu_custom_call.1} parent=75 // pred_check
          %p494 = pneg %p126
        $region86: #{tpu_custom_call.1} parent=75 // pred_check_branch
          %496 = sbr.rel (%p494) target = $region88
        $region87: #{tpu_custom_call.1} parent=75 // pred_region
          %497 = dma.done [#allocation7], 2048
        $region88: #{tpu_custom_call.1} parent=75 // pred_fallthru
          _
        // Predicated region
        $region89: #{tpu_custom_call.1} parent=75 // pred_check
          %p498 = pneg %p168
        $region90: #{tpu_custom_call.1} parent=75 // pred_check_branch
          %500 = sbr.rel (%p498) target = $region92
        $region91: #{tpu_custom_call.1} parent=75 // pred_region
          %501 = dma.done [#allocation10], 512
        $region92: #{tpu_custom_call.1} parent=75 // pred_fallthru
          _
        %s502 = sand.u32 %s45, 1
        %s503 = scalar_lea.sflag [#allocation4], %s502
        %s504 = sand.u32 %s45, 1
        %s505 = scalar_lea.vmem [#allocation3], %s504
        %p506 = pneg %p58
        %p507 = pneg %p55
        %s508 = sand.u32 %s37, 1
        %s509 = scalar_lea.sflag [#allocation7], %s508
        %s510 = sand.u32 %s71, 1
        %s511 = scalar_lea.vmem [#allocation6], %s510
        %p512 = pneg %p84
        %p513 = pneg %p81
        %p514 = pneg %p105
        %p515 = pneg %p102
        %p516 = pneg %p126
        %p517 = pneg %p123
        %p518 = pneg %p147
        %p519 = pneg %p144
        %p520 = pneg %p168
        %p521 = pneg %p165
        %p522 = pneg %p189
        %p523 = pneg %p186
        %p524 = pneg %p210
        %p525 = pneg %p207
        %p526 = pneg %p231
        %p527 = pneg %p228
        %p528 = pneg %p252
        %p529 = pneg %p249
        %p530 = pneg %p273
        %p531 = pneg %p270
        %p532 = pneg %p294
        %p533 = pneg %p291
        %p534 = pneg %p315
        %p535 = pneg %p312
        %p536 = pneg %p336
        %p537 = pneg %p333
        %p538 = pneg %p362
        %p539 = pneg %p359
        %s540 = sand.u32 %s349, 1
        %s541 = scalar_lea.sflag [#allocation5], %s540
        %s542 = sand.u32 %s349, 1
        %s543 = scalar_lea.vmem [#allocation11], %s542
        %v544 = vlaneseq
        %v545 = vshrl.u32 %v544, 7
        %v546 = vadd.s32 %v545, 8
        %v547 = vadd.s32 %v545, 16
        %v548 = vadd.s32 %v545, 24
        %v549 = vadd.s32 %v545, 32
        %v550 = vadd.s32 %v545, 40
        %v551 = vadd.s32 %v545, 48
        %v552 = vadd.s32 %v545, 56
        %v553 = vadd.s32 %v545, 64
        %v554 = vadd.s32 %v545, 72
        %v555 = vadd.s32 %v545, 80
        %v556 = vadd.s32 %v545, 88
        %v557 = vadd.s32 %v545, 96
        %v558 = vadd.s32 %v545, 104
        %v559 = vadd.s32 %v545, 112
        %v560 = vadd.s32 %v545, 120
        %v561 = vld [vmem:[%s481] sm:$0x1]
        %v562 = vlaneseq
        %v563 = vshrl.u32 %v562, 7
        %v564 = vsub.s32 0, %v563
        %v565 = vrot.slane %v561, %v564
        %vm566 = vcmp.eq.s32.totalorder %v545, %v565
        %vm567 = vcmp.eq.s32.totalorder %v546, %v565
        %vm568 = vcmp.eq.s32.totalorder %v547, %v565
        %vm569 = vcmp.eq.s32.totalorder %v548, %v565
        %vm570 = vcmp.eq.s32.totalorder %v549, %v565
        %vm571 = vcmp.eq.s32.totalorder %v550, %v565
        %vm572 = vcmp.eq.s32.totalorder %v551, %v565
        %vm573 = vcmp.eq.s32.totalorder %v552, %v565
        %vm574 = vcmp.eq.s32.totalorder %v553, %v565
        %vm575 = vcmp.eq.s32.totalorder %v554, %v565
        %vm576 = vcmp.eq.s32.totalorder %v555, %v565
        %vm577 = vcmp.eq.s32.totalorder %v556, %v565
        %vm578 = vcmp.eq.s32.totalorder %v557, %v565
        %vm579 = vcmp.eq.s32.totalorder %v558, %v565
        %vm580 = vcmp.eq.s32.totalorder %v559, %v565
        %vm581 = vcmp.eq.s32.totalorder %v560, %v565
        %v582 = vsel %vm566, 1.0, 0.0
        %v583 = vsel %vm567, 1.0, 0.0
        %v584 = vsel %vm568, 1.0, 0.0
        %v585 = vsel %vm569, 1.0, 0.0
        %v586 = vsel %vm570, 1.0, 0.0
        %v587 = vsel %vm571, 1.0, 0.0
        %v588 = vsel %vm572, 1.0, 0.0
        %v589 = vsel %vm573, 1.0, 0.0
        %v590 = vsel %vm574, 1.0, 0.0
        %v591 = vsel %vm575, 1.0, 0.0
        %v592 = vsel %vm576, 1.0, 0.0
        %v593 = vsel %vm577, 1.0, 0.0
        %v594 = vsel %vm578, 1.0, 0.0
        %v595 = vsel %vm579, 1.0, 0.0
        %v596 = vsel %vm580, 1.0, 0.0
        %v597 = vsel %vm581, 1.0, 0.0
        %v598 = vadd.s32 %v545, 128
        %v599 = vadd.s32 %v545, 136
        %v600 = vadd.s32 %v545, 144
        %v601 = vadd.s32 %v545, 152
        %v602 = vadd.s32 %v545, 160
        %v603 = vadd.s32 %v545, 168
        %v604 = vadd.s32 %v545, 176
        %v605 = vadd.s32 %v545, 184
        %v606 = vadd.s32 %v545, 192
        %v607 = vadd.s32 %v545, 200
        %v608 = vadd.s32 %v545, 208
        %v609 = vadd.s32 %v545, 216
        %v610 = vadd.s32 %v545, 224
        %v611 = vadd.s32 %v545, 232
        %v612 = vadd.s32 %v545, 240
        %v613 = vadd.s32 %v545, 248
        %v614 = vld [vmem:[%s489] sm:$0x1]
        %v615 = vlaneseq
        %v616 = vshrl.u32 %v615, 7
        %v617 = vsub.s32 0, %v616
        %v618 = vrot.slane %v614, %v617
        %vm619 = vcmp.eq.s32.totalorder %v545, %v618
        %vm620 = vcmp.eq.s32.totalorder %v546, %v618
        %vm621 = vcmp.eq.s32.totalorder %v547, %v618
        %vm622 = vcmp.eq.s32.totalorder %v548, %v618
        %vm623 = vcmp.eq.s32.totalorder %v549, %v618
        %vm624 = vcmp.eq.s32.totalorder %v550, %v618
        %vm625 = vcmp.eq.s32.totalorder %v551, %v618
        %vm626 = vcmp.eq.s32.totalorder %v552, %v618
        %vm627 = vcmp.eq.s32.totalorder %v553, %v618
        %vm628 = vcmp.eq.s32.totalorder %v554, %v618
        %vm629 = vcmp.eq.s32.totalorder %v555, %v618
        %vm630 = vcmp.eq.s32.totalorder %v556, %v618
        %vm631 = vcmp.eq.s32.totalorder %v557, %v618
        %vm632 = vcmp.eq.s32.totalorder %v558, %v618
        %vm633 = vcmp.eq.s32.totalorder %v559, %v618
        %vm634 = vcmp.eq.s32.totalorder %v560, %v618
        %vm635 = vcmp.eq.s32.totalorder %v598, %v618
        %vm636 = vcmp.eq.s32.totalorder %v599, %v618
        %vm637 = vcmp.eq.s32.totalorder %v600, %v618
        %vm638 = vcmp.eq.s32.totalorder %v601, %v618
        %vm639 = vcmp.eq.s32.totalorder %v602, %v618
        %vm640 = vcmp.eq.s32.totalorder %v603, %v618
        %vm641 = vcmp.eq.s32.totalorder %v604, %v618
        %vm642 = vcmp.eq.s32.totalorder %v605, %v618
        %vm643 = vcmp.eq.s32.totalorder %v606, %v618
        %vm644 = vcmp.eq.s32.totalorder %v607, %v618
        %vm645 = vcmp.eq.s32.totalorder %v608, %v618
        %vm646 = vcmp.eq.s32.totalorder %v609, %v618
        %vm647 = vcmp.eq.s32.totalorder %v610, %v618
        %vm648 = vcmp.eq.s32.totalorder %v611, %v618
        %vm649 = vcmp.eq.s32.totalorder %v612, %v618
        %vm650 = vcmp.eq.s32.totalorder %v613, %v618
        %v651 = vsel %vm619, 1.0, 0.0
        %v652 = vsel %vm620, 1.0, 0.0
        %v653 = vsel %vm621, 1.0, 0.0
        %v654 = vsel %vm622, 1.0, 0.0
        %v655 = vsel %vm623, 1.0, 0.0
        %v656 = vsel %vm624, 1.0, 0.0
        %v657 = vsel %vm625, 1.0, 0.0
        %v658 = vsel %vm626, 1.0, 0.0
        %v659 = vsel %vm627, 1.0, 0.0
        %v660 = vsel %vm628, 1.0, 0.0
        %v661 = vsel %vm629, 1.0, 0.0
        %v662 = vsel %vm630, 1.0, 0.0
        %v663 = vsel %vm631, 1.0, 0.0
        %v664 = vsel %vm632, 1.0, 0.0
        %v665 = vsel %vm633, 1.0, 0.0
        %v666 = vsel %vm634, 1.0, 0.0
        %v667 = vsel %vm635, 1.0, 0.0
        %v668 = vsel %vm636, 1.0, 0.0
        %v669 = vsel %vm637, 1.0, 0.0
        %v670 = vsel %vm638, 1.0, 0.0
        %v671 = vsel %vm639, 1.0, 0.0
        %v672 = vsel %vm640, 1.0, 0.0
        %v673 = vsel %vm641, 1.0, 0.0
        %v674 = vsel %vm642, 1.0, 0.0
        %v675 = vsel %vm643, 1.0, 0.0
        %v676 = vsel %vm644, 1.0, 0.0
        %v677 = vsel %vm645, 1.0, 0.0
        %v678 = vsel %vm646, 1.0, 0.0
        %v679 = vsel %vm647, 1.0, 0.0
        %v680 = vsel %vm648, 1.0, 0.0
        %v681 = vsel %vm649, 1.0, 0.0
        %v682 = vsel %vm650, 1.0, 0.0
        %v683 = vld [vmem:[%s2] sm:$0xff]
        %v684 = vld [vmem:[%s2 + $0x8] sm:$0xff]
        %v685 = vld [vmem:[%s2 + $0x10] sm:$0xff]
        %v686 = vld [vmem:[%s2 + $0x18] sm:$0xff]
        %v687 = vld [vmem:[%s2 + $0x20] sm:$0xff]
        %v688 = vld [vmem:[%s2 + $0x28] sm:$0xff]
        %v689 = vld [vmem:[%s2 + $0x30] sm:$0xff]
        %v690 = vld [vmem:[%s2 + $0x38] sm:$0xff]
        %691 = vmatprep.subr.mxu0 0.0
        %692 = vmatpush1.msra.mxu0 %v582
        %693 = vmatprep.subr.mxu0 0.0
        %694 = vmatpush1.msra.mxu0 %v583
        %695 = vmatprep.subr.mxu0 0.0
        %696 = vmatpush1.msra.mxu0 %v584
        %697 = vmatprep.subr.mxu0 0.0
        %698 = vmatpush1.msra.mxu0 %v585
        %699 = vmatprep.subr.mxu0 0.0
        %700 = vmatpush1.msra.mxu0 %v586
        %701 = vmatprep.subr.mxu0 0.0
        %702 = vmatpush1.msra.mxu0 %v587
        %703 = vmatprep.subr.mxu0 0.0
        %704 = vmatpush1.msra.mxu0 %v588
        %705 = vmatprep.subr.mxu0 0.0
        %706 = vmatpush1.msra.mxu0 %v589
        %707 = vmatprep.subr.mxu0 0.0
        %708 = vmatpush1.msra.mxu0 %v590
        %709 = vmatprep.subr.mxu0 0.0
        %710 = vmatpush1.msra.mxu0 %v591
        %711 = vmatprep.subr.mxu0 0.0
        %712 = vmatpush1.msra.mxu0 %v592
        %713 = vmatprep.subr.mxu0 0.0
        %714 = vmatpush1.msra.mxu0 %v593
        %715 = vmatprep.subr.mxu0 0.0
        %716 = vmatpush1.msra.mxu0 %v594
        %717 = vmatprep.subr.mxu0 0.0
        %718 = vmatpush1.msra.mxu0 %v595
        %719 = vmatprep.subr.mxu0 0.0
        %720 = vmatpush1.msra.mxu0 %v596
        %721 = vmatprep.subr.mxu0 0.0
        %722 = vmatpush1.msra.mxu0 %v597
        %723 = vmatprep.subr.mxu0 0.0
        %724 = vmatpush1.msra.mxu0 0.0
        %725 = vmatprep.subr.mxu0 0.0
        %726 = vmatpush1.msra.mxu0 0.0
        %727 = vmatprep.subr.mxu0 0.0
        %728 = vmatpush1.msra.mxu0 0.0
        %729 = vmatprep.subr.mxu0 0.0
        %730 = vmatpush1.msra.mxu0 0.0
        %731 = vmatprep.subr.mxu0 0.0
        %732 = vmatpush1.msra.mxu0 0.0
        %733 = vmatprep.subr.mxu0 0.0
        %734 = vmatpush1.msra.mxu0 0.0
        %735 = vmatprep.subr.mxu0 0.0
        %736 = vmatpush1.msra.mxu0 0.0
        %737 = vmatprep.subr.mxu0 0.0
        %738 = vmatpush1.msra.mxu0 0.0
        %739 = vmatprep.subr.mxu0 0.0
        %740 = vmatpush1.msra.mxu0 0.0
        %741 = vmatprep.subr.mxu0 0.0
        %742 = vmatpush1.msra.mxu0 0.0
        %743 = vmatprep.subr.mxu0 0.0
        %744 = vmatpush1.msra.mxu0 0.0
        %745 = vmatprep.subr.mxu0 0.0
        %746 = vmatpush1.msra.mxu0 0.0
        %747 = vmatprep.subr.mxu0 0.0
        %748 = vmatpush1.msra.mxu0 0.0
        %749 = vmatprep.subr.mxu0 0.0
        %750 = vmatpush1.msra.mxu0 0.0
        %751 = vmatprep.subr.mxu0 0.0
        %752 = vmatpush1.msra.mxu0 0.0
        %753 = vmatprep.subr.mxu0 0.0
        %754 = vmatpush1.msra.mxu0 0.0
        %755 = vmatprep.mubr.f32.mxu0 0.0
        %756 = vmatmul.mubr.f32.gmra.mrb[0].mxu0 %v683
        %v757 = vpop.f32.mrb[0].mxu0
        %v758 = vadd.f32 0.0, %v757
        %v759 = vpop.f32.mrb[0].mxu0
        %760 = vmatprep.mubr.f32.mxu0 0.0
        %761 = vmatmul.mubr.f32.gmra.mrb[0].mxu0 %v684
        %v762 = vpop.f32.mrb[0].mxu0
        %v763 = vadd.f32 0.0, %v762
        %v764 = vpop.f32.mrb[0].mxu0
        %765 = vmatprep.mubr.f32.mxu0 0.0
        %766 = vmatmul.mubr.f32.gmra.mrb[0].mxu0 %v685
        %v767 = vpop.f32.mrb[0].mxu0
        %v768 = vadd.f32 0.0, %v767
        %v769 = vpop.f32.mrb[0].mxu0
        %770 = vmatprep.mubr.f32.mxu0 0.0
        %771 = vmatmul.mubr.f32.gmra.mrb[0].mxu0 %v686
        %v772 = vpop.f32.mrb[0].mxu0
        %v773 = vadd.f32 0.0, %v772
        %v774 = vpop.f32.mrb[0].mxu0
        %775 = vmatprep.mubr.f32.mxu0 0.0
        %776 = vmatmul.mubr.f32.gmra.mrb[0].mxu0 %v687
        %v777 = vpop.f32.mrb[0].mxu0
        %v778 = vadd.f32 0.0, %v777
        %v779 = vpop.f32.mrb[0].mxu0
        %780 = vmatprep.mubr.f32.mxu0 0.0
        %781 = vmatmul.mubr.f32.gmra.mrb[0].mxu0 %v688
        %v782 = vpop.f32.mrb[0].mxu0
        %v783 = vadd.f32 0.0, %v782
        %v784 = vpop.f32.mrb[0].mxu0
        %785 = vmatprep.mubr.f32.mxu0 0.0
        %786 = vmatmul.mubr.f32.gmra.mrb[0].mxu0 %v689
        %v787 = vpop.f32.mrb[0].mxu0
        %v788 = vadd.f32 0.0, %v787
        %v789 = vpop.f32.mrb[0].mxu0
        %790 = vmatprep.mubr.f32.mxu0 0.0
        %791 = vmatmul.mubr.f32.gmra.mrb[0].mxu0 %v690
        %v792 = vpop.f32.mrb[0].mxu0
        %v793 = vadd.f32 0.0, %v792
        %v794 = vpop.f32.mrb[0].mxu0
        %795 = vdwg.mxu0
        %v796 = vld [vmem:[#allocation8] sm:$0xff]
        %v797 = vld [vmem:[#allocation8 + $0x8] sm:$0xff]
        %v798 = vld [vmem:[#allocation8 + $0x10] sm:$0xff]
        %v799 = vld [vmem:[#allocation8 + $0x18] sm:$0xff]
        %v800 = vld [vmem:[#allocation8 + $0x20] sm:$0xff]
        %v801 = vld [vmem:[#allocation8 + $0x28] sm:$0xff]
        %v802 = vld [vmem:[#allocation8 + $0x30] sm:$0xff]
        %v803 = vld [vmem:[#allocation8 + $0x38] sm:$0xff]
        %v804 = vld [vmem:[#allocation8 + $0x40] sm:$0xff]
        %v805 = vld [vmem:[#allocation8 + $0x48] sm:$0xff]
        %v806 = vld [vmem:[#allocation8 + $0x50] sm:$0xff]
        %v807 = vld [vmem:[#allocation8 + $0x58] sm:$0xff]
        %v808 = vld [vmem:[#allocation8 + $0x60] sm:$0xff]
        %v809 = vld [vmem:[#allocation8 + $0x68] sm:$0xff]
        %v810 = vld [vmem:[#allocation8 + $0x70] sm:$0xff]
        %v811 = vld [vmem:[#allocation8 + $0x78] sm:$0xff]
        %812 = vmatprep.subr.mxu0 0.0
        %813 = vmatpush1.msra.mxu0 %v651
        %814 = vmatprep.subr.mxu0 0.0
        %815 = vmatpush1.msra.mxu0 %v652
        %816 = vmatprep.subr.mxu0 0.0
        %817 = vmatpush1.msra.mxu0 %v653
        %818 = vmatprep.subr.mxu0 0.0
        %819 = vmatpush1.msra.mxu0 %v654
        %820 = vmatprep.subr.mxu0 0.0
        %821 = vmatpush1.msra.mxu0 %v655
        %822 = vmatprep.subr.mxu0 0.0
        %823 = vmatpush1.msra.mxu0 %v656
        %824 = vmatprep.subr.mxu0 0.0
        %825 = vmatpush1.msra.mxu0 %v657
        %826 = vmatprep.subr.mxu0 0.0
        %827 = vmatpush1.msra.mxu0 %v658
        %828 = vmatprep.subr.mxu0 0.0
        %829 = vmatpush1.msra.mxu0 %v659
        %830 = vmatprep.subr.mxu0 0.0
        %831 = vmatpush1.msra.mxu0 %v660
        %832 = vmatprep.subr.mxu0 0.0
        %833 = vmatpush1.msra.mxu0 %v661
        %834 = vmatprep.subr.mxu0 0.0
        %835 = vmatpush1.msra.mxu0 %v662
        %836 = vmatprep.subr.mxu0 0.0
        %837 = vmatpush1.msra.mxu0 %v663
        %838 = vmatprep.subr.mxu0 0.0
        %839 = vmatpush1.msra.mxu0 %v664
        %840 = vmatprep.subr.mxu0 0.0
        %841 = vmatpush1.msra.mxu0 %v665
        %842 = vmatprep.subr.mxu0 0.0
        %843 = vmatpush1.msra.mxu0 %v666
        %844 = vmatprep.subr.mxu0 0.0
        %845 = vmatpush1.msra.mxu0 %v667
        %846 = vmatprep.subr.mxu0 0.0
        %847 = vmatpush1.msra.mxu0 %v668
        %848 = vmatprep.subr.mxu0 0.0
        %849 = vmatpush1.msra.mxu0 %v669
        %850 = vmatprep.subr.mxu0 0.0
        %851 = vmatpush1.msra.mxu0 %v670
        %852 = vmatprep.subr.mxu0 0.0
        %853 = vmatpush1.msra.mxu0 %v671
        %854 = vmatprep.subr.mxu0 0.0
        %855 = vmatpush1.msra.mxu0 %v672
        %856 = vmatprep.subr.mxu0 0.0
        %857 = vmatpush1.msra.mxu0 %v673
        %858 = vmatprep.subr.mxu0 0.0
        %859 = vmatpush1.msra.mxu0 %v674
        %860 = vmatprep.subr.mxu0 0.0
        %861 = vmatpush1.msra.mxu0 %v675
        %862 = vmatprep.subr.mxu0 0.0
        %863 = vmatpush1.msra.mxu0 %v676
        %864 = vmatprep.subr.mxu0 0.0
        %865 = vmatpush1.msra.mxu0 %v677
        %866 = vmatprep.subr.mxu0 0.0
        %867 = vmatpush1.msra.mxu0 %v678
        %868 = vmatprep.subr.mxu0 0.0
        %869 = vmatpush1.msra.mxu0 %v679
        %870 = vmatprep.subr.mxu0 0.0
        %871 = vmatpush1.msra.mxu0 %v680
        %872 = vmatprep.subr.mxu0 0.0
        %873 = vmatpush1.msra.mxu0 %v681
        %874 = vmatprep.subr.mxu0 0.0
        %875 = vmatpush1.msra.mxu0 %v682
        %876 = vmatprep.mubr.f32.mxu0 %v797
        %877 = vmatmul.mubr.f32.gmra.mrb[0].mxu0 %v796
        %v878 = vpop.f32.mrb[0].mxu0
        %v879 = vadd.f32 0.0, %v878
        %v880 = vpop.f32.mrb[0].mxu0
        %881 = vmatprep.mubr.f32.mxu0 %v799
        %882 = vmatmul.mubr.f32.gmra.mrb[0].mxu0 %v798
        %v883 = vpop.f32.mrb[0].mxu0
        %v884 = vadd.f32 0.0, %v883
        %v885 = vpop.f32.mrb[0].mxu0
        %886 = vmatprep.mubr.f32.mxu0 %v801
        %887 = vmatmul.mubr.f32.gmra.mrb[0].mxu0 %v800
        %v888 = vpop.f32.mrb[0].mxu0
        %v889 = vadd.f32 0.0, %v888
        %v890 = vpop.f32.mrb[0].mxu0
        %891 = vmatprep.mubr.f32.mxu0 %v803
        %892 = vmatmul.mubr.f32.gmra.mrb[0].mxu0 %v802
        %v893 = vpop.f32.mrb[0].mxu0
        %v894 = vadd.f32 0.0, %v893
        %v895 = vpop.f32.mrb[0].mxu0
        %896 = vmatprep.mubr.f32.mxu0 %v805
        %897 = vmatmul.mubr.f32.gmra.mrb[0].mxu0 %v804
        %v898 = vpop.f32.mrb[0].mxu0
        %v899 = vadd.f32 0.0, %v898
        %v900 = vpop.f32.mrb[0].mxu0
        %901 = vmatprep.mubr.f32.mxu0 %v807
        %902 = vmatmul.mubr.f32.gmra.mrb[0].mxu0 %v806
        %v903 = vpop.f32.mrb[0].mxu0
        %v904 = vadd.f32 0.0, %v903
        %v905 = vpop.f32.mrb[0].mxu0
        %906 = vmatprep.mubr.f32.mxu0 %v809
        %907 = vmatmul.mubr.f32.gmra.mrb[0].mxu0 %v808
        %v908 = vpop.f32.mrb[0].mxu0
        %v909 = vadd.f32 0.0, %v908
        %v910 = vpop.f32.mrb[0].mxu0
        %911 = vmatprep.mubr.f32.mxu0 %v811
        %912 = vmatmul.mubr.f32.gmra.mrb[0].mxu0 %v810
        %v913 = vpop.f32.mrb[0].mxu0
        %v914 = vadd.f32 0.0, %v913
        %v915 = vpop.f32.mrb[0].mxu0
        %916 = vdwg.mxu0
        %v917 = vmul.f32 %v758, %v879
        %v918 = vmul.f32 %v763, %v884
        %v919 = vmul.f32 %v768, %v889
        %v920 = vmul.f32 %v773, %v894
        %v921 = vld [vmem:[%s4] sm:$0xff]
        %v922 = vld [vmem:[%s4 + $0x8] sm:$0xff]
        %v923 = vld [vmem:[%s4 + $0x10] sm:$0xff]
        %v924 = vld [vmem:[%s4 + $0x18] sm:$0xff]
        %v925 = vld [vmem:[#allocation9] sm:$0xff]
        %v926 = vld [vmem:[#allocation9 + $0x8] sm:$0xff]
        %v927 = vld [vmem:[#allocation9 + $0x10] sm:$0xff]
        %v928 = vld [vmem:[#allocation9 + $0x18] sm:$0xff]
        %vm929 = vcmask 261120
        %v931 = vsel %vm929, %v925, 0
        %v934 = vsel %vm929, %v926, 0
        %v937 = vsel %vm929, %v927, 0
        %v940 = vsel %vm929, %v928, 0
        %942 = vmatprep.subr.mxu0 0.0
        %943 = vmatpush1.msra.mxu0 %v899
        %944 = vmatprep.subr.mxu0 0.0
        %945 = vmatpush1.msra.mxu0 %v904
        %946 = vmatprep.subr.mxu0 0.0
        %947 = vmatpush1.msra.mxu0 %v909
        %948 = vmatprep.subr.mxu0 0.0
        %949 = vmatpush1.msra.mxu0 %v914
        %950 = vmatprep.subr.mxu0 0.0
        %951 = vmatpush1.msra.mxu0 0.0
        %952 = vmatprep.subr.mxu0 0.0
        %953 = vmatpush1.msra.mxu0 0.0
        %954 = vmatprep.subr.mxu0 0.0
        %955 = vmatpush1.msra.mxu0 0.0
        %956 = vmatprep.subr.mxu0 0.0
        %957 = vmatpush1.msra.mxu0 0.0
        %958 = vmatprep.subr.mxu0 0.0
        %959 = vmatpush1.msra.mxu0 0.0
        %960 = vmatprep.subr.mxu0 0.0
        %961 = vmatpush1.msra.mxu0 0.0
        %962 = vmatprep.subr.mxu0 0.0
        %963 = vmatpush1.msra.mxu0 0.0
        %964 = vmatprep.subr.mxu0 0.0
        %965 = vmatpush1.msra.mxu0 0.0
        %966 = vmatprep.subr.mxu0 0.0
        %967 = vmatpush1.msra.mxu0 0.0
        %968 = vmatprep.subr.mxu0 0.0
        %969 = vmatpush1.msra.mxu0 0.0
        %970 = vmatprep.subr.mxu0 0.0
        %971 = vmatpush1.msra.mxu0 0.0
        %972 = vmatprep.subr.mxu0 0.0
        %973 = vmatpush1.msra.mxu0 0.0
        %974 = vmatprep.subr.mxu0 0.0
        %975 = vmatpush1.msra.mxu0 0.0
        %976 = vmatprep.subr.mxu0 0.0
        %977 = vmatpush1.msra.mxu0 0.0
        %978 = vmatprep.subr.mxu0 0.0
        %979 = vmatpush1.msra.mxu0 0.0
        %980 = vmatprep.subr.mxu0 0.0
        %981 = vmatpush1.msra.mxu0 0.0
        %982 = vmatprep.subr.mxu0 0.0
        %983 = vmatpush1.msra.mxu0 0.0
        %984 = vmatprep.subr.mxu0 0.0
        %985 = vmatpush1.msra.mxu0 0.0
        %986 = vmatprep.subr.mxu0 0.0
        %987 = vmatpush1.msra.mxu0 0.0
        %988 = vmatprep.subr.mxu0 0.0
        %989 = vmatpush1.msra.mxu0 0.0
        %990 = vmatprep.subr.mxu0 0.0
        %991 = vmatpush1.msra.mxu0 0.0
        %992 = vmatprep.subr.mxu0 0.0
        %993 = vmatpush1.msra.mxu0 0.0
        %994 = vmatprep.subr.mxu0 0.0
        %995 = vmatpush1.msra.mxu0 0.0
        %996 = vmatprep.subr.mxu0 0.0
        %997 = vmatpush1.msra.mxu0 0.0
        %998 = vmatprep.subr.mxu0 0.0
        %999 = vmatpush1.msra.mxu0 0.0
        %1000 = vmatprep.subr.mxu0 0.0
        %1001 = vmatpush1.msra.mxu0 0.0
        %1002 = vmatprep.subr.mxu0 0.0
        %1003 = vmatpush1.msra.mxu0 0.0
        %1004 = vmatprep.subr.mxu0 0.0
        %1005 = vmatpush1.msra.mxu0 0.0
        %1006 = vmatprep.mubr.f32.mxu0 0.0
        %1007 = vmatmul.mubr.f32.gmra.mrb[0].mxu0 %v931
        %v1008 = vpop.f32.mrb[0].mxu0
        %v1009 = vadd.f32 0.0, %v1008
        %v1010 = vpop.f32.mrb[0].mxu0
        %1011 = vmatprep.mubr.f32.mxu0 0.0
        %1012 = vmatmul.mubr.f32.gmra.mrb[0].mxu0 %v934
        %v1013 = vpop.f32.mrb[0].mxu0
        %v1014 = vadd.f32 0.0, %v1013
        %v1015 = vpop.f32.mrb[0].mxu0
        %1016 = vmatprep.mubr.f32.mxu0 0.0
        %1017 = vmatmul.mubr.f32.gmra.mrb[0].mxu0 %v937
        %v1018 = vpop.f32.mrb[0].mxu0
        %v1019 = vadd.f32 0.0, %v1018
        %v1020 = vpop.f32.mrb[0].mxu0
        %1021 = vmatprep.mubr.f32.mxu0 0.0
        %1022 = vmatmul.mubr.f32.gmra.mrb[0].mxu0 %v940
        %v1023 = vpop.f32.mrb[0].mxu0
        %v1024 = vadd.f32 0.0, %v1023
        %v1025 = vpop.f32.mrb[0].mxu0
        %1026 = vdwg.mxu0
        %v1028 = vsel %vm929, %v921, 0
        %v1031 = vsel %vm929, %v922, 0
        %v1034 = vsel %vm929, %v923, 0
        %v1037 = vsel %vm929, %v924, 0
        %1039 = vmatprep.subr.mxu0 0.0
        %1040 = vmatpush1.msra.mxu0 %v778
        %1041 = vmatprep.subr.mxu0 0.0
        %1042 = vmatpush1.msra.mxu0 %v783
        %1043 = vmatprep.subr.mxu0 0.0
        %1044 = vmatpush1.msra.mxu0 %v788
        %1045 = vmatprep.subr.mxu0 0.0
        %1046 = vmatpush1.msra.mxu0 %v793
        %1047 = vmatprep.subr.mxu0 0.0
        %1048 = vmatpush1.msra.mxu0 0.0
        %1049 = vmatprep.subr.mxu0 0.0
        %1050 = vmatpush1.msra.mxu0 0.0
        %1051 = vmatprep.subr.mxu0 0.0
        %1052 = vmatpush1.msra.mxu0 0.0
        %1053 = vmatprep.subr.mxu0 0.0
        %1054 = vmatpush1.msra.mxu0 0.0
        %1055 = vmatprep.subr.mxu0 0.0
        %1056 = vmatpush1.msra.mxu0 0.0
        %1057 = vmatprep.subr.mxu0 0.0
        %1058 = vmatpush1.msra.mxu0 0.0
        %1059 = vmatprep.subr.mxu0 0.0
        %1060 = vmatpush1.msra.mxu0 0.0
        %1061 = vmatprep.subr.mxu0 0.0
        %1062 = vmatpush1.msra.mxu0 0.0
        %1063 = vmatprep.subr.mxu0 0.0
        %1064 = vmatpush1.msra.mxu0 0.0
        %1065 = vmatprep.subr.mxu0 0.0
        %1066 = vmatpush1.msra.mxu0 0.0
        %1067 = vmatprep.subr.mxu0 0.0
        %1068 = vmatpush1.msra.mxu0 0.0
        %1069 = vmatprep.subr.mxu0 0.0
        %1070 = vmatpush1.msra.mxu0 0.0
        %1071 = vmatprep.subr.mxu0 0.0
        %1072 = vmatpush1.msra.mxu0 0.0
        %1073 = vmatprep.subr.mxu0 0.0
        %1074 = vmatpush1.msra.mxu0 0.0
        %1075 = vmatprep.subr.mxu0 0.0
        %1076 = vmatpush1.msra.mxu0 0.0
        %1077 = vmatprep.subr.mxu0 0.0
        %1078 = vmatpush1.msra.mxu0 0.0
        %1079 = vmatprep.subr.mxu0 0.0
        %1080 = vmatpush1.msra.mxu0 0.0
        %1081 = vmatprep.subr.mxu0 0.0
        %1082 = vmatpush1.msra.mxu0 0.0
        %1083 = vmatprep.subr.mxu0 0.0
        %1084 = vmatpush1.msra.mxu0 0.0
        %1085 = vmatprep.subr.mxu0 0.0
        %1086 = vmatpush1.msra.mxu0 0.0
        %1087 = vmatprep.subr.mxu0 0.0
        %1088 = vmatpush1.msra.mxu0 0.0
        %1089 = vmatprep.subr.mxu0 0.0
        %1090 = vmatpush1.msra.mxu0 0.0
        %1091 = vmatprep.subr.mxu0 0.0
        %1092 = vmatpush1.msra.mxu0 0.0
        %1093 = vmatprep.subr.mxu0 0.0
        %1094 = vmatpush1.msra.mxu0 0.0
        %1095 = vmatprep.subr.mxu0 0.0
        %1096 = vmatpush1.msra.mxu0 0.0
        %1097 = vmatprep.subr.mxu0 0.0
        %1098 = vmatpush1.msra.mxu0 0.0
        %1099 = vmatprep.subr.mxu0 0.0
        %1100 = vmatpush1.msra.mxu0 0.0
        %1101 = vmatprep.subr.mxu0 0.0
        %1102 = vmatpush1.msra.mxu0 0.0
        %1103 = vmatprep.mubr.f32.mxu0 0.0
        %1104 = vmatmul.mubr.f32.gmra.mrb[0].mxu0 %v1028
        %v1105 = vpop.f32.mrb[0].mxu0
        %v1106 = vadd.f32 %v1009, %v1105
        %v1107 = vpop.f32.mrb[0].mxu0
        %1108 = vmatprep.mubr.f32.mxu0 0.0
        %1109 = vmatmul.mubr.f32.gmra.mrb[0].mxu0 %v1031
        %v1110 = vpop.f32.mrb[0].mxu0
        %v1111 = vadd.f32 %v1014, %v1110
        %v1112 = vpop.f32.mrb[0].mxu0
        %1113 = vmatprep.mubr.f32.mxu0 0.0
        %1114 = vmatmul.mubr.f32.gmra.mrb[0].mxu0 %v1034
        %v1115 = vpop.f32.mrb[0].mxu0
        %v1116 = vadd.f32 %v1019, %v1115
        %v1117 = vpop.f32.mrb[0].mxu0
        %1118 = vmatprep.mubr.f32.mxu0 0.0
        %1119 = vmatmul.mubr.f32.gmra.mrb[0].mxu0 %v1037
        %v1120 = vpop.f32.mrb[0].mxu0
        %v1121 = vadd.f32 %v1024, %v1120
        %v1122 = vpop.f32.mrb[0].mxu0
        %1123 = vdwg.mxu0
        %v1124 = vld [vmem:[%s6] sm:$0xff]
        %v1125 = vld [vmem:[%s6 + $0x8] sm:$0xff]
        %v1126 = vld [vmem:[%s6 + $0x10] sm:$0xff]
        %v1127 = vld [vmem:[%s6 + $0x18] sm:$0xff]
        %1129 = vset.pattern.permute.xlu0 0
        %1130 = vperm.xlu0 %1129, %v1124
        %v1131 = vpop.permute.xlu0 %1130
        %1134 = vset.pattern.permute.xlu0 0
        %1135 = vperm.xlu0 %1134, %v1125
        %v1136 = vpop.permute.xlu0 %1135
        %1139 = vset.pattern.permute.xlu0 0
        %1140 = vperm.xlu0 %1139, %v1126
        %v1141 = vpop.permute.xlu0 %1140
        %1144 = vset.pattern.permute.xlu0 0
        %1145 = vperm.xlu0 %1144, %v1127
        %v1146 = vpop.permute.xlu0 %1145
        %v1148 = vadd.f32 %v1106, %v1131
        %v1149 = vadd.f32 %v1111, %v1136
        %v1150 = vadd.f32 %v1116, %v1141
        %v1151 = vadd.f32 %v1121, %v1146
        %v1152 = vmax.f32 %v1148, 0.0
        %v1153 = vmax.f32 %v1149, 0.0
        %v1154 = vmax.f32 %v1150, 0.0
        %v1155 = vmax.f32 %v1151, 0.0
        %v1156 = vld [vmem:[%s7] sm:$0xff]
        %v1157 = vld [vmem:[%s7 + $0x8] sm:$0xff]
        %v1158 = vld [vmem:[%s8] sm:$0xff]
        %v1159 = vld [vmem:[%s8 + $0x8] sm:$0xff]
        %1161 = vset.pattern.permute.xlu0 0
        %1162 = vperm.xlu0 %1161, %v1158
        %v1163 = vpop.permute.xlu0 %1162
        %1166 = vset.pattern.permute.xlu0 0
        %1167 = vperm.xlu0 %1166, %v1159
        %v1168 = vpop.permute.xlu0 %1167
        %v1171 = vsel %vm929, %v1156, 0
        %v1174 = vsel %vm929, %v1157, 0
        %1176 = vmatprep.subr.mxu0 0.0
        %1177 = vmatpush1.msra.mxu0 %v1152
        %1178 = vmatprep.subr.mxu0 0.0
        %1179 = vmatpush1.msra.mxu0 %v1153
        %1180 = vmatprep.subr.mxu0 0.0
        %1181 = vmatpush1.msra.mxu0 %v1154
        %1182 = vmatprep.subr.mxu0 0.0
        %1183 = vmatpush1.msra.mxu0 %v1155
        %1184 = vmatprep.subr.mxu0 0.0
        %1185 = vmatpush1.msra.mxu0 0.0
        %1186 = vmatprep.subr.mxu0 0.0
        %1187 = vmatpush1.msra.mxu0 0.0
        %1188 = vmatprep.subr.mxu0 0.0
        %1189 = vmatpush1.msra.mxu0 0.0
        %1190 = vmatprep.subr.mxu0 0.0
        %1191 = vmatpush1.msra.mxu0 0.0
        %1192 = vmatprep.subr.mxu0 0.0
        %1193 = vmatpush1.msra.mxu0 0.0
        %1194 = vmatprep.subr.mxu0 0.0
        %1195 = vmatpush1.msra.mxu0 0.0
        %1196 = vmatprep.subr.mxu0 0.0
        %1197 = vmatpush1.msra.mxu0 0.0
        %1198 = vmatprep.subr.mxu0 0.0
        %1199 = vmatpush1.msra.mxu0 0.0
        %1200 = vmatprep.subr.mxu0 0.0
        %1201 = vmatpush1.msra.mxu0 0.0
        %1202 = vmatprep.subr.mxu0 0.0
        %1203 = vmatpush1.msra.mxu0 0.0
        %1204 = vmatprep.subr.mxu0 0.0
        %1205 = vmatpush1.msra.mxu0 0.0
        %1206 = vmatprep.subr.mxu0 0.0
        %1207 = vmatpush1.msra.mxu0 0.0
        %1208 = vmatprep.subr.mxu0 0.0
        %1209 = vmatpush1.msra.mxu0 0.0
        %1210 = vmatprep.subr.mxu0 0.0
        %1211 = vmatpush1.msra.mxu0 0.0
        %1212 = vmatprep.subr.mxu0 0.0
        %1213 = vmatpush1.msra.mxu0 0.0
        %1214 = vmatprep.subr.mxu0 0.0
        %1215 = vmatpush1.msra.mxu0 0.0
        %1216 = vmatprep.subr.mxu0 0.0
        %1217 = vmatpush1.msra.mxu0 0.0
        %1218 = vmatprep.subr.mxu0 0.0
        %1219 = vmatpush1.msra.mxu0 0.0
        %1220 = vmatprep.subr.mxu0 0.0
        %1221 = vmatpush1.msra.mxu0 0.0
        %1222 = vmatprep.subr.mxu0 0.0
        %1223 = vmatpush1.msra.mxu0 0.0
        %1224 = vmatprep.subr.mxu0 0.0
        %1225 = vmatpush1.msra.mxu0 0.0
        %1226 = vmatprep.subr.mxu0 0.0
        %1227 = vmatpush1.msra.mxu0 0.0
        %1228 = vmatprep.subr.mxu0 0.0
        %1229 = vmatpush1.msra.mxu0 0.0
        %1230 = vmatprep.subr.mxu0 0.0
        %1231 = vmatpush1.msra.mxu0 0.0
        %1232 = vmatprep.subr.mxu0 0.0
        %1233 = vmatpush1.msra.mxu0 0.0
        %1234 = vmatprep.subr.mxu0 0.0
        %1235 = vmatpush1.msra.mxu0 0.0
        %1236 = vmatprep.subr.mxu0 0.0
        %1237 = vmatpush1.msra.mxu0 0.0
        %1238 = vmatprep.subr.mxu0 0.0
        %1239 = vmatpush1.msra.mxu0 0.0
        %1240 = vmatprep.mubr.f32.mxu0 0.0
        %1241 = vmatmul.mubr.f32.gmra.mrb[0].mxu0 %v1171
        %v1242 = vpop.f32.mrb[0].mxu0
        %v1243 = vadd.f32 %v1163, %v1242
        %v1244 = vpop.f32.mrb[0].mxu0
        %1245 = vmatprep.mubr.f32.mxu0 0.0
        %1246 = vmatmul.mubr.f32.gmra.mrb[0].mxu0 %v1174
        %v1247 = vpop.f32.mrb[0].mxu0
        %v1248 = vadd.f32 %v1168, %v1247
        %v1249 = vpop.f32.mrb[0].mxu0
        %1250 = vdwg.mxu0
        %v1251 = vmax.f32 %v1243, 0.0
        %v1252 = vmax.f32 %v1248, 0.0
        %v1253 = vld [vmem:[%s9] sm:$0xff]
        %v1254 = vld [vmem:[%s10] sm:$0xff]
        %1256 = vset.pattern.permute.xlu0 0
        %1257 = vperm.xlu0 %1256, %v1254
        %v1258 = vpop.permute.xlu0 %1257
        %vm1260 = vcmask 130048
        %v1262 = vsel %vm1260, %v1253, 0
        %1264 = vmatprep.subr.mxu0 0.0
        %1265 = vmatpush1.msra.mxu0 %v1251
        %1266 = vmatprep.subr.mxu0 0.0
        %1267 = vmatpush1.msra.mxu0 %v1252
        %1268 = vmatprep.subr.mxu0 0.0
        %1269 = vmatpush1.msra.mxu0 0.0
        %1270 = vmatprep.subr.mxu0 0.0
        %1271 = vmatpush1.msra.mxu0 0.0
        %1272 = vmatprep.subr.mxu0 0.0
        %1273 = vmatpush1.msra.mxu0 0.0
        %1274 = vmatprep.subr.mxu0 0.0
        %1275 = vmatpush1.msra.mxu0 0.0
        %1276 = vmatprep.subr.mxu0 0.0
        %1277 = vmatpush1.msra.mxu0 0.0
        %1278 = vmatprep.subr.mxu0 0.0
        %1279 = vmatpush1.msra.mxu0 0.0
        %1280 = vmatprep.subr.mxu0 0.0
        %1281 = vmatpush1.msra.mxu0 0.0
        %1282 = vmatprep.subr.mxu0 0.0
        %1283 = vmatpush1.msra.mxu0 0.0
        %1284 = vmatprep.subr.mxu0 0.0
        %1285 = vmatpush1.msra.mxu0 0.0
        %1286 = vmatprep.subr.mxu0 0.0
        %1287 = vmatpush1.msra.mxu0 0.0
        %1288 = vmatprep.subr.mxu0 0.0
        %1289 = vmatpush1.msra.mxu0 0.0
        %1290 = vmatprep.subr.mxu0 0.0
        %1291 = vmatpush1.msra.mxu0 0.0
        %1292 = vmatprep.subr.mxu0 0.0
        %1293 = vmatpush1.msra.mxu0 0.0
        %1294 = vmatprep.subr.mxu0 0.0
        %1295 = vmatpush1.msra.mxu0 0.0
        %1296 = vmatprep.subr.mxu0 0.0
        %1297 = vmatpush1.msra.mxu0 0.0
        %1298 = vmatprep.subr.mxu0 0.0
        %1299 = vmatpush1.msra.mxu0 0.0
        %1300 = vmatprep.subr.mxu0 0.0
        %1301 = vmatpush1.msra.mxu0 0.0
        %1302 = vmatprep.subr.mxu0 0.0
        %1303 = vmatpush1.msra.mxu0 0.0
        %1304 = vmatprep.subr.mxu0 0.0
        %1305 = vmatpush1.msra.mxu0 0.0
        %1306 = vmatprep.subr.mxu0 0.0
        %1307 = vmatpush1.msra.mxu0 0.0
        %1308 = vmatprep.subr.mxu0 0.0
        %1309 = vmatpush1.msra.mxu0 0.0
        %1310 = vmatprep.subr.mxu0 0.0
        %1311 = vmatpush1.msra.mxu0 0.0
        %1312 = vmatprep.subr.mxu0 0.0
        %1313 = vmatpush1.msra.mxu0 0.0
        %1314 = vmatprep.subr.mxu0 0.0
        %1315 = vmatpush1.msra.mxu0 0.0
        %1316 = vmatprep.subr.mxu0 0.0
        %1317 = vmatpush1.msra.mxu0 0.0
        %1318 = vmatprep.subr.mxu0 0.0
        %1319 = vmatpush1.msra.mxu0 0.0
        %1320 = vmatprep.subr.mxu0 0.0
        %1321 = vmatpush1.msra.mxu0 0.0
        %1322 = vmatprep.subr.mxu0 0.0
        %1323 = vmatpush1.msra.mxu0 0.0
        %1324 = vmatprep.subr.mxu0 0.0
        %1325 = vmatpush1.msra.mxu0 0.0
        %1326 = vmatprep.subr.mxu0 0.0
        %1327 = vmatpush1.msra.mxu0 0.0
        %1328 = vmatprep.mubr.f32.mxu0 0.0
        %1329 = vmatmul.mubr.f32.gmra.mrb[0].mxu0 %v1262
        %v1330 = vpop.f32.mrb[0].mxu0
        %v1331 = vadd.f32 %v1258, %v1330
        %v1332 = vpop.f32.mrb[0].mxu0
        %1333 = vdwg.mxu0
        %v1334 = vld [vmem:[%s11] sm:$0xff]
        %1336 = vset.pattern.permute.xlu0 0
        %1337 = vperm.xlu0 %1336, %v1334
        %v1338 = vpop.permute.xlu0 %1337
        %v1340 = vmul.f32 %v1338, %v1331
        %v1341 = vrot.slane %v1340, 4
        %v1342 = vadd.f32 %v1340, %v1341
        %v1343 = vrot.slane %v1342, 2
        %v1344 = vadd.f32 %v1342, %v1343
        %v1345 = vrot.slane %v1344, 1
        %v1346 = vadd.f32 %v1344, %v1345
        %v1347 = vld [vmem:[%s12] sm:$0xff]
        %v1348 = vld [vmem:[%s12 + $0x8] sm:$0xff]
        %v1349 = vld [vmem:[%s12 + $0x10] sm:$0xff]
        %v1350 = vld [vmem:[%s12 + $0x18] sm:$0xff]
        %1352 = vset.pattern.permute.xlu0 0
        %1353 = vperm.xlu0 %1352, %v1347
        %v1354 = vpop.permute.xlu0 %1353
        %1357 = vset.pattern.permute.xlu0 0
        %1358 = vperm.xlu0 %1357, %v1348
        %v1359 = vpop.permute.xlu0 %1358
        %1362 = vset.pattern.permute.xlu0 0
        %1363 = vperm.xlu0 %1362, %v1349
        %v1364 = vpop.permute.xlu0 %1363
        %1367 = vset.pattern.permute.xlu0 0
        %1368 = vperm.xlu0 %1367, %v1350
        %v1369 = vpop.permute.xlu0 %1368
        %v1371 = vmul.f32 %v1354, %v917
        %v1372 = vmul.f32 %v1359, %v918
        %v1373 = vmul.f32 %v1364, %v919
        %v1374 = vmul.f32 %v1369, %v920
        %v1375 = vadd.f32 %v1371, %v1372
        %v1376 = vadd.f32 %v1375, %v1373
        %v1377 = vadd.f32 %v1376, %v1374
        %v1378 = vrot.slane %v1377, 4
        %v1379 = vadd.f32 %v1377, %v1378
        %v1380 = vrot.slane %v1379, 2
        %v1381 = vadd.f32 %v1379, %v1380
        %v1382 = vrot.slane %v1381, 1
        %v1383 = vadd.f32 %v1381, %v1382
        %v1384 = vadd.f32 %v1346, %v1383
        %v1385 = vld [vmem:[#allocation2] sm:$0x1]
        %1387 = vset.pattern.permute.xlu0 0
        %1388 = vperm.xlu0 %1387, %v1385
        %v1389 = vpop.permute.xlu0 %1388
        %v1391 = vlaneseq
        %v1392 = vshrl.u32 %v1391, 7
        %v1393 = vsub.s32 0, %v1392
        %v1394 = vrot.slane %v1389, %v1393
        %v1395 = vadd.f32 %v1384, %v1394
        %v1396 = vxor.u32 %v1395, 2147483648
        %v1397 = vmul.f32 %v1396, 1.442695
        %v1398 = vpow.pop %v1397
        %v1399 = vadd.f32 %v1398, 1.0
        %v1400 = vrcp.pop %v1399
        %v1401 = vmul.f32 1.0, %v1400
        %1402 = vst [vmem:[%s543] sm:$0x1] %v1401
        %s1403 = sand.u32 %s349, 1
        %s1404 = scalar_lea.sflag [#allocation5], %s1403
        %s1405 = sand.u32 %s349, 1
        %s1406 = scalar_lea.vmem [#allocation11], %s1405
        // Predicated region
        $region93: #{tpu_custom_call.1} parent=75 // pred_check
          %p1407 = pneg %p359
        $region94: #{tpu_custom_call.1} parent=75 // pred_check_branch
          %1409 = sbr.rel (%p1407) target = $region96
        $region95: #{tpu_custom_call.1} parent=75 // pred_region
          %s1411 = ssub.s32 16, 16
          %1412 = vsyncadd %s1404, %s1411
          %s1413 = smul.addr %s37, 16
          %s1414 = scalar_lea.hbm %s14, %s1413
          %s1416 = sshll.u32 %s1406, 4
          %s1417 = int_to_ptr.vmem [resolvable:$true] %s1416
          %1419 = dma.vmem_to_hbm [thread:$0]  %s1417, 16, %s1414, %s1404
        $region96: #{tpu_custom_call.1} parent=75 // pred_fallthru
          _
      $region76: #{tpu_custom_call.1} parent=5 // pred_fallthru
        _
      %p1420 = scmp.le.s32.totalorder 2, %s32
      // Predicated region
      $region97: #{tpu_custom_call.1} parent=5 // pred_check
        %p1421 = pneg %p1420
      $region98: #{tpu_custom_call.1} parent=5 // pred_check_branch
        %1423 = sbr.rel (%p1421) target = $region100
      $region99: #{tpu_custom_call.1} parent=5 // pred_region
        %s1424 = ssub.s32 %s32, 2
        // Predicated region
        $region101: #{tpu_custom_call.1} parent=99 // pred_check
          %p1425 = pneg %p365
        $region102: #{tpu_custom_call.1} parent=99 // pred_check_branch
          %1427 = sbr.rel (%p1425) target = $region104
        $region103: #{tpu_custom_call.1} parent=99 // pred_region
          %s1428 = sand.u32 %s350, 1
          %s1429 = scalar_lea.sflag [#allocation5], %s1428
          %s1430 = sand.u32 %s350, 1
          %s1431 = scalar_lea.vmem [#allocation11], %s1430
          %1432 = dma.done %s1429, 16
        $region104: #{tpu_custom_call.1} parent=99 // pred_fallthru
          _
      $region100: #{tpu_custom_call.1} parent=5 // pred_fallthru
        _
    $region6: #{tpu_custom_call.1} parent=1 // loop_footer
      %s36 = sadd.s32 1, %s32
    $region7: #{tpu_custom_call.1} parent=1 // loop_footer_branch
      %31 = sbr.rel target = $region3
    $region8: #{tpu_custom_call.1} parent=1 // loop_exit
      _
    %1433 = vsyncpa [#allocation4], 1
    %s1434 = scalar_lea.sflag [#allocation4], 1
    %1435 = vsyncpa %s1434, 1
    %1436 = vsyncpa [#allocation7], 1
    %s1437 = scalar_lea.sflag [#allocation7], 1
    %1438 = vsyncpa %s1437, 1
    %1439 = vsyncpa [#allocation10], 1
    %1440 = vsyncpa [#allocation5], 1
    %s1441 = scalar_lea.sflag [#allocation5], 1
    %1442 = vsyncpa %s1441, 1

</llo_original>
